<compile_context>
chip_gen: v7x
topology: tpu7x:2x2x1
jax: 0.10.0
libtpu: 0.0.40
codegen_flags: <defaults>
</compile_context>

<pallas_src>
import functools

import jax
import jax.numpy as jnp
from jax import lax
from jax.experimental import pallas as pl
from jax.experimental.pallas import tpu as pltpu


def _round_up(v, m):
    return (v + m - 1) // m * m


def _pick_q_tile(n):
    """Largest power-of-two query tile (<=256) that divides N; else no tiling."""
    for tq in (256, 128, 64, 32, 16, 8):
        if n % tq == 0:
            return tq
    return n


# -----------------------------------------------------------------------------
# Kernel: one (batch, query-tile) pair per grid step.
# -----------------------------------------------------------------------------
def _flash_attention_kernel(
    x_q_ref, x_kv_ref, wq_ref, wk_ref, wv_ref, wout_ref, bout_ref,
    *rest, heads, dim_head, scale, compute_dtype, exp_dtype, store_att,
):
    # x_q_ref:  (1, TQ, E)    x_kv_ref: (1, N, E)
    # wq/wk/wv: (H, E, D)     wout_ref: (inner, E)   bout_ref: (1, E) f32
    # outputs:  o_ref (1, TQ, E) [, att_ref (1, H, TQ, N)]
    # scratch:  kv_ref (2, H, N, D) compute_dtype, slab_ref (TQ, inner) compute_dtype
    if store_att:
        o_ref, att_ref, kv_ref, slab_ref = rest
    else:
        o_ref, kv_ref, slab_ref = rest
        att_ref = None

    # ---- K/V projection: once per batch element (first query tile only). ----
    # kv_ref persists across grid steps; the q-tile axis is "arbitrary" (in-order)
    # so qt == 0 always runs first for each batch element.
    @pl.when(pl.program_id(1) == 0)
    def _():
        x_kv = x_kv_ref[0].astype(compute_dtype)                       # (N, E)
        for h in range(heads):                                         # static unroll
            kv_ref[0, h] = jnp.dot(
                x_kv, wk_ref[h], preferred_element_type=jnp.float32
            ).astype(compute_dtype)                                    # K_h (N, D)
            kv_ref[1, h] = jnp.dot(
                x_kv, wv_ref[h], preferred_element_type=jnp.float32
            ).astype(compute_dtype)                                    # V_h (N, D)

    # ---- Attention for this query tile ----
    x_q = x_q_ref[0].astype(compute_dtype)                             # (TQ, E)
    for h in range(heads):                                             # static unroll
        # Q projection for this head / tile (clean (E, D) weight slab, no lane slicing).
        q = jnp.dot(x_q, wq_ref[h], preferred_element_type=jnp.float32)  # (TQ, D) f32
        # Scale Q once (TQ*D mults), not the (TQ, N) score matrix.
        q = (q * scale).astype(compute_dtype)
        k = kv_ref[0, h]                                               # (N, D)
        v = kv_ref[1, h]                                               # (N, D)

        # QK^T via dot_general contracting the D axes — no explicit transpose of K.
        s = lax.dot_general(
            q, k, (((1,), (1,)), ((), ())),
            preferred_element_type=jnp.float32,
        )                                                              # (TQ, N) f32

        # Numerically-stable softmax; statistics in f32.  exp optionally in bf16
        # (v6e/v7x EUP packs 2/lane) via exp_dtype.
        m = jnp.max(s, axis=-1, keepdims=True)
        p = jnp.exp((s - m).astype(exp_dtype)).astype(jnp.float32)
        denom = jnp.sum(p, axis=-1, keepdims=True)
        attn = p * pl.reciprocal(denom, approx=True)                   # (TQ, N) f32

        if store_att:
            att_ref[0, h] = attn.astype(att_ref.dtype)                 # inspection copy

        # attn @ V, then write this head's (TQ, D) result into the merge slab —
        # ends its live range immediately (no list of per-head results, no concat).
        pv = jnp.dot(attn.astype(compute_dtype), v,
                     preferred_element_type=jnp.float32)               # (TQ, D) f32
        slab_ref[:, h * dim_head:(h + 1) * dim_head] = pv.astype(compute_dtype)

    # to_out: Linear(inner, E) + Dropout(0.0) (identity).  Single well-shaped matmul
    # with full `inner` contraction from the scratch slab.
    out_cat = slab_ref[...]                                            # (TQ, inner)
    y = jnp.dot(out_cat, wout_ref[...], preferred_element_type=jnp.float32)
    y = y + bout_ref[...].astype(jnp.float32)                          # (1,E)->(TQ,E)
    o_ref[0] = y.astype(o_ref.dtype)


# -----------------------------------------------------------------------------
# VMEM budget computed from actual block sizes (per-generation cap).
# -----------------------------------------------------------------------------
def _vmem_limit_bytes(N, q_tile, E, heads, dim_head, x_item, out_item, att_item,
                      comp_item, store_att):
    inner = heads * dim_head

    def tile_bytes(rows, cols, item):
        return _round_up(max(rows, 1), 8) * _round_up(max(cols, 1), 128) * item

    need = 0
    need += 2 * tile_bytes(q_tile, E, x_item)                    # x q-tile (dbl buf)
    need += 2 * tile_bytes(N, E, x_item)                         # x full-seq (dbl buf)
    need += 2 * 3 * heads * tile_bytes(E, dim_head, comp_item)   # wq/wk/wv
    need += 2 * tile_bytes(inner, E, comp_item)                  # w_out
    need += 2 * tile_bytes(1, E, 4)                              # b_out
    need += 2 * tile_bytes(q_tile, E, out_item)                  # out
    if store_att:
        need += 2 * heads * tile_bytes(q_tile, N, att_item)      # att_map tile
    need += 2 * heads * tile_bytes(N, dim_head, comp_item)       # K/V scratch
    need += tile_bytes(q_tile, inner, comp_item)                 # merge slab
    need = int(need * 1.5) + (4 << 20)                           # headroom

    try:
        cap = pltpu.get_tpu_info().vmem_capacity_bytes           # per-generation
    except Exception:
        cap = 64 << 20                                           # conservative (v7x)
    return int(min(max(need, 16 << 20), cap * 3 // 4))


# -----------------------------------------------------------------------------
# Wrapper around pallas_call
# -----------------------------------------------------------------------------
def attention_forward(params, x, heads, dim_head, *,
                      compute_dtype=jnp.bfloat16, att_dtype=jnp.float32,
                      exp_dtype=jnp.float32, return_att_map=True, q_tile=None):
    """Implements Attention.forward.  x: (B, N, E).

    Returns (out, att_map) with out: (B, N, E), att_map: (B, H, N, N) or None
    when return_att_map=False (skips the O(N^2) HBM write).
    """
    B, N, E = x.shape
    inner = heads * dim_head
    scale = dim_head ** (-0.5)

    if q_tile is None:
        q_tile = _pick_q_tile(N)
    assert N % q_tile == 0, f"query tile {q_tile} must divide N={N}"
    n_qt = N // q_tile

    # Head-major per-head weight slabs (H, E, D): each head reads a clean slab in
    # the kernel instead of a 16-lane column slice of a wide matrix.  Done once,
    # wrapper-side (free XLA reshapes); weights cast to the compute dtype, bias f32.
    w_qkv = params["w_qkv"]
    def _per_head(w):                                  # (E, inner) -> (H, E, D)
        return w.reshape(E, heads, dim_head).transpose(1, 0, 2).astype(compute_dtype)
    wq = _per_head(w_qkv[:, :inner])
    wk = _per_head(w_qkv[:, inner:2 * inner])
    wv = _per_head(w_qkv[:, 2 * inner:])
    w_out = params["w_out"].astype(compute_dtype)                      # (inner, E)
    b_out = params["b_out"].reshape(1, E).astype(jnp.float32)

    kernel = functools.partial(
        _flash_attention_kernel,
        heads=heads, dim_head=dim_head, scale=scale,
        compute_dtype=compute_dtype, exp_dtype=exp_dtype, store_att=return_att_map,
    )

    in_specs = [
        pl.BlockSpec((1, q_tile, E), lambda b, qt: (b, qt, 0)),         # x (query tile)
        pl.BlockSpec((1, N, E), lambda b, qt: (b, 0, 0)),               # x (full seq, K/V)
        pl.BlockSpec((heads, E, dim_head), lambda b, qt: (0, 0, 0)),    # wq (resident)
        pl.BlockSpec((heads, E, dim_head), lambda b, qt: (0, 0, 0)),    # wk (resident)
        pl.BlockSpec((heads, E, dim_head), lambda b, qt: (0, 0, 0)),    # wv (resident)
        pl.BlockSpec((inner, E), lambda b, qt: (0, 0)),                 # w_out (resident)
        pl.BlockSpec((1, E), lambda b, qt: (0, 0)),                     # b_out (resident)
    ]
    # TODO(synk): weights with constant index_maps could be single-buffered
    # (pipeline_mode=pl.Buffered(1)) to free VMEM headroom on v7x.

    out_shapes = [jax.ShapeDtypeStruct((B, N, E), x.dtype)]
    out_specs = [pl.BlockSpec((1, q_tile, E), lambda b, qt: (b, qt, 0))]
    if return_att_map:
        out_shapes.append(jax.ShapeDtypeStruct((B, heads, N, N), att_dtype))
        out_specs.append(pl.BlockSpec((1, heads, q_tile, N),
                                      lambda b, qt: (b, 0, qt, 0)))

    scratch_shapes = [
        pltpu.VMEM((2, heads, N, dim_head), compute_dtype),   # K/V for current batch b
        pltpu.VMEM((q_tile, inner), compute_dtype),           # head-merge slab
    ]

    vmem_limit = _vmem_limit_bytes(
        N, q_tile, E, heads, dim_head,
        x_item=jnp.dtype(x.dtype).itemsize,
        out_item=jnp.dtype(x.dtype).itemsize,
        att_item=jnp.dtype(att_dtype).itemsize,
        comp_item=jnp.dtype(compute_dtype).itemsize,
        store_att=return_att_map,
    )

    results = pl.pallas_call(
        kernel,
        out_shape=tuple(out_shapes) if return_att_map else out_shapes[0],
        grid=(B, n_qt),
        in_specs=in_specs,
        out_specs=tuple(out_specs) if return_att_map else out_specs[0],
        scratch_shapes=scratch_shapes,
        compiler_params=pltpu.CompilerParams(
            dimension_semantics=("parallel", "arbitrary"),
            vmem_limit_bytes=vmem_limit,
        ),
    )(x, x, wq, wk, wv, w_out, b_out)

    if return_att_map:
        out, att = results
        return out, att
    return results, None


# -----------------------------------------------------------------------------
# Parameter init + pure-JAX reference
# -----------------------------------------------------------------------------
def init_params(key, embed_dim, heads, dim_head):
    inner_dim = dim_head * heads
    k1, k2, k3 = jax.random.split(key, 3)
    w_qkv = jax.random.normal(k1, (embed_dim, inner_dim * 3), jnp.float32) * 0.02
    w_out = jax.random.normal(k2, (inner_dim, embed_dim), jnp.float32) * 0.02
    b_out = jax.random.normal(k3, (embed_dim,), jnp.float32) * 0.02
    return {"w_qkv": w_qkv, "w_out": w_out, "b_out": b_out}


def attention_reference(params, x, heads, dim_head):
    B, N, E = x.shape
    inner_dim = heads * dim_head
    scale = dim_head ** (-0.5)
    qkv = x @ params["w_qkv"]
    q, k, v = jnp.split(qkv, 3, axis=-1)
    rh = lambda t: t.reshape(B, N, heads, dim_head).transpose(0, 2, 1, 3)
    q, k, v = rh(q), rh(k), rh(v)
    dots = jnp.einsum("bhnd,bhmd->bhnm", q, k) * scale
    attn = jax.nn.softmax(dots, axis=-1)
    out = jnp.einsum("bhnm,bhmd->bhnd", attn, v)
    out = out.transpose(0, 2, 1, 3).reshape(B, N, inner_dim)
    out = out @ params["w_out"] + params["b_out"]
    return out, attn


if __name__ == "__main__":
    # Small shapes consistent with the module's forward.
    # NOTE: at these demo sizes (N=8, E=32) output stores are masked partial
    # stores; at production sizes (N, E multiples of 128) they are lane-dense.
    B, N, E = 2, 8, 32
    heads, dim_head = 4, 16      # inner_dim = 64, project_out = True

    key = jax.random.PRNGKey(0)
    kx, kp = jax.random.split(key)
    x = jax.random.normal(kx, (B, N, E), jnp.float32)
    params = init_params(kp, E, heads, dim_head)

    # Full path: fused attention + att_map inspection output.
    out, att_map = attention_forward(params, x, heads, dim_head)
    out = jax.block_until_ready(out)
    att_map = jax.block_until_ready(att_map)

    # Fast path: skip the O(N^2) att_map HBM write.
    out_fast, _ = attention_forward(params, x, heads, dim_head, return_att_map=False)
    out_fast = jax.block_until_ready(out_fast)

    ref_out, ref_att = attention_reference(params, x, heads, dim_head)
    assert out.shape == (B, N, E)
    assert att_map.shape == (B, heads, N, N)
    # bf16 matmul operands (f32 accumulation) + approx reciprocal -> loosened but
    # still tight tolerances vs. the f32 reference.
    assert jnp.allclose(out, ref_out, atol=5e-3, rtol=5e-2), (
        float(jnp.max(jnp.abs(out - ref_out))))
    assert jnp.allclose(out_fast, ref_out, atol=5e-3, rtol=5e-2), (
        float(jnp.max(jnp.abs(out_fast - ref_out))))
    assert jnp.allclose(att_map, ref_att, atol=5e-3, rtol=5e-2), (
        float(jnp.max(jnp.abs(att_map - ref_att))))

    print("KERNEL_OK")
</pallas_src>

<mosaic_0001>
module attributes {stable_mosaic.version = 11 : i64} {
  func.func @_flash_attention_kernel(%arg0: i32, %arg1: i32, %arg2: memref<1x8x32xf32, #tpu.memory_space<vmem>>, %arg3: memref<1x8x32xf32, #tpu.memory_space<vmem>>, %arg4: memref<4x32x16xbf16, #tpu.memory_space<vmem>>, %arg5: memref<4x32x16xbf16, #tpu.memory_space<vmem>>, %arg6: memref<4x32x16xbf16, #tpu.memory_space<vmem>>, %arg7: memref<64x32xbf16, #tpu.memory_space<vmem>>, %arg8: memref<1x32xf32, #tpu.memory_space<vmem>>, %arg9: memref<1x8x32xf32, #tpu.memory_space<vmem>>, %arg10: memref<1x4x8x8xf32, #tpu.memory_space<vmem>>, %arg11: memref<2x4x8x16xbf16, #tpu.memory_space<vmem>>, %arg12: memref<8x64xbf16, #tpu.memory_space<vmem>>) attributes {dimension_semantics = [#tpu.dimension_semantics<parallel>, #tpu.dimension_semantics<arbitrary>], iteration_bounds = array<i64: 2, 1>, scalar_prefetch = 0 : i64, scratch_operands = 2 : i64, tpu.core_type = #tpu.core_type<tc>, window_params = [{transform_indices = @transform_0, window_bounds = array<i64: 1, 8, 32>}, {transform_indices = @transform_1, window_bounds = array<i64: 1, 8, 32>}, {pipeline_mode = #tpu.pipeline_mode<synchronous>, transform_indices = @transform_2, window_bounds = array<i64: 4, 32, 16>}, {pipeline_mode = #tpu.pipeline_mode<synchronous>, transform_indices = @transform_3, window_bounds = array<i64: 4, 32, 16>}, {pipeline_mode = #tpu.pipeline_mode<synchronous>, transform_indices = @transform_4, window_bounds = array<i64: 4, 32, 16>}, {pipeline_mode = #tpu.pipeline_mode<synchronous>, transform_indices = @transform_5, window_bounds = array<i64: 64, 32>}, {pipeline_mode = #tpu.pipeline_mode<synchronous>, transform_indices = @transform_6, window_bounds = array<i64: 1, 32>}, {transform_indices = @transform_7, window_bounds = array<i64: 1, 8, 32>}, {transform_indices = @transform_8, window_bounds = array<i64: 1, 4, 8, 8>}]} {
    %c0_i32 = arith.constant 0 : i32
    %0 = arith.cmpi eq, %arg1, %c0_i32 : i32
    %1 = arith.extui %0 : i1 to i32
    %c0_i32_0 = arith.constant 0 : i32
    %2 = arith.cmpi ne, %1, %c0_i32_0 : i32
    scf.if %2 {
      %c0_98 = arith.constant 0 : index
      %c0_99 = arith.constant 0 : index
      %c0_100 = arith.constant 0 : index
      %127 = vector.load %arg3[%c0_98, %c0_99, %c0_100] : memref<1x8x32xf32, #tpu.memory_space<vmem>>, vector<1x8x32xf32>
      %128 = vector.shape_cast %127 : vector<1x8x32xf32> to vector<8x32xf32>
      %129 = arith.truncf %128 : vector<8x32xf32> to vector<8x32xbf16>
      %c0_101 = arith.constant 0 : index
      %c0_102 = arith.constant 0 : index
      %c0_103 = arith.constant 0 : index
      %130 = vector.load %arg5[%c0_101, %c0_102, %c0_103] : memref<4x32x16xbf16, #tpu.memory_space<vmem>>, vector<1x32x16xbf16>
      %131 = vector.shape_cast %130 : vector<1x32x16xbf16> to vector<32x16xbf16>
      %cst_104 = arith.constant dense<0.000000e+00> : vector<8x16xf32>
      %132 = tpu.matmul %129, %131, %cst_104 {dimension_numbers = #tpu.dot_dimension_numbers<[1], [0], [0], [1], [0, 0, 1, 1], [], []>} : vector<8x32xbf16>, vector<32x16xbf16>, vector<8x16xf32> -> vector<8x16xf32>
      %133 = arith.truncf %132 : vector<8x16xf32> to vector<8x16xbf16>
      %c0_105 = arith.constant 0 : index
      %c0_106 = arith.constant 0 : index
      %c0_107 = arith.constant 0 : index
      %c0_108 = arith.constant 0 : index
      %134 = vector.load %arg11[%c0_105, %c0_106, %c0_107, %c0_108] : memref<2x4x8x16xbf16, #tpu.memory_space<vmem>>, vector<1x1x8x16xbf16>
      %135 = vector.shape_cast %134 : vector<1x1x8x16xbf16> to vector<8x16xbf16>
      %136 = vector.shape_cast %133 : vector<8x16xbf16> to vector<1x1x8x16xbf16>
      tpu.vector_store %arg11[%c0_105, %c0_106, %c0_107, %c0_108], %136 {strides = array<i32>} : memref<2x4x8x16xbf16, #tpu.memory_space<vmem>>, vector<1x1x8x16xbf16>,
      %c0_109 = arith.constant 0 : index
      %c0_110 = arith.constant 0 : index
      %c0_111 = arith.constant 0 : index
      %137 = vector.load %arg6[%c0_109, %c0_110, %c0_111] : memref<4x32x16xbf16, #tpu.memory_space<vmem>>, vector<1x32x16xbf16>
      %138 = vector.shape_cast %137 : vector<1x32x16xbf16> to vector<32x16xbf16>
      %cst_112 = arith.constant dense<0.000000e+00> : vector<8x16xf32>
      %139 = tpu.matmul %129, %138, %cst_112 {dimension_numbers = #tpu.dot_dimension_numbers<[1], [0], [0], [1], [0, 0, 1, 1], [], []>} : vector<8x32xbf16>, vector<32x16xbf16>, vector<8x16xf32> -> vector<8x16xf32>
      %140 = arith.truncf %139 : vector<8x16xf32> to vector<8x16xbf16>
      %c1_113 = arith.constant 1 : index
      %c0_114 = arith.constant 0 : index
      %c0_115 = arith.constant 0 : index
      %c0_116 = arith.constant 0 : index
      %141 = vector.load %arg11[%c1_113, %c0_114, %c0_115, %c0_116] : memref<2x4x8x16xbf16, #tpu.memory_space<vmem>>, vector<1x1x8x16xbf16>
      %142 = vector.shape_cast %141 : vector<1x1x8x16xbf16> to vector<8x16xbf16>
      %143 = vector.shape_cast %140 : vector<8x16xbf16> to vector<1x1x8x16xbf16>
      tpu.vector_store %arg11[%c1_113, %c0_114, %c0_115, %c0_116], %143 {strides = array<i32>} : memref<2x4x8x16xbf16, #tpu.memory_space<vmem>>, vector<1x1x8x16xbf16>,
      %c1_117 = arith.constant 1 : index
      %c0_118 = arith.constant 0 : index
      %c0_119 = arith.constant 0 : index
      %144 = vector.load %arg5[%c1_117, %c0_118, %c0_119] : memref<4x32x16xbf16, #tpu.memory_space<vmem>>, vector<1x32x16xbf16>
      %145 = vector.shape_cast %144 : vector<1x32x16xbf16> to vector<32x16xbf16>
      %cst_120 = arith.constant dense<0.000000e+00> : vector<8x16xf32>
      %146 = tpu.matmul %129, %145, %cst_120 {dimension_numbers = #tpu.dot_dimension_numbers<[1], [0], [0], [1], [0, 0, 1, 1], [], []>} : vector<8x32xbf16>, vector<32x16xbf16>, vector<8x16xf32> -> vector<8x16xf32>
      %147 = arith.truncf %146 : vector<8x16xf32> to vector<8x16xbf16>
      %c0_121 = arith.constant 0 : index
      %c1_122 = arith.constant 1 : index
      %c0_123 = arith.constant 0 : index
      %c0_124 = arith.constant 0 : index
      %148 = vector.load %arg11[%c0_121, %c1_122, %c0_123, %c0_124] : memref<2x4x8x16xbf16, #tpu.memory_space<vmem>>, vector<1x1x8x16xbf16>
      %149 = vector.shape_cast %148 : vector<1x1x8x16xbf16> to vector<8x16xbf16>
      %150 = vector.shape_cast %147 : vector<8x16xbf16> to vector<1x1x8x16xbf16>
      tpu.vector_store %arg11[%c0_121, %c1_122, %c0_123, %c0_124], %150 {strides = array<i32>} : memref<2x4x8x16xbf16, #tpu.memory_space<vmem>>, vector<1x1x8x16xbf16>,
      %c1_125 = arith.constant 1 : index
      %c0_126 = arith.constant 0 : index
      %c0_127 = arith.constant 0 : index
      %151 = vector.load %arg6[%c1_125, %c0_126, %c0_127] : memref<4x32x16xbf16, #tpu.memory_space<vmem>>, vector<1x32x16xbf16>
      %152 = vector.shape_cast %151 : vector<1x32x16xbf16> to vector<32x16xbf16>
      %cst_128 = arith.constant dense<0.000000e+00> : vector<8x16xf32>
      %153 = tpu.matmul %129, %152, %cst_128 {dimension_numbers = #tpu.dot_dimension_numbers<[1], [0], [0], [1], [0, 0, 1, 1], [], []>} : vector<8x32xbf16>, vector<32x16xbf16>, vector<8x16xf32> -> vector<8x16xf32>
      %154 = arith.truncf %153 : vector<8x16xf32> to vector<8x16xbf16>
      %c1_129 = arith.constant 1 : index
      %c1_130 = arith.constant 1 : index
      %c0_131 = arith.constant 0 : index
      %c0_132 = arith.constant 0 : index
      %155 = vector.load %arg11[%c1_129, %c1_130, %c0_131, %c0_132] : memref<2x4x8x16xbf16, #tpu.memory_space<vmem>>, vector<1x1x8x16xbf16>
      %156 = vector.shape_cast %155 : vector<1x1x8x16xbf16> to vector<8x16xbf16>
      %157 = vector.shape_cast %154 : vector<8x16xbf16> to vector<1x1x8x16xbf16>
      tpu.vector_store %arg11[%c1_129, %c1_130, %c0_131, %c0_132], %157 {strides = array<i32>} : memref<2x4x8x16xbf16, #tpu.memory_space<vmem>>, vector<1x1x8x16xbf16>,
      %c2_133 = arith.constant 2 : index
      %c0_134 = arith.constant 0 : index
      %c0_135 = arith.constant 0 : index
      %158 = vector.load %arg5[%c2_133, %c0_134, %c0_135] : memref<4x32x16xbf16, #tpu.memory_space<vmem>>, vector<1x32x16xbf16>
      %159 = vector.shape_cast %158 : vector<1x32x16xbf16> to vector<32x16xbf16>
      %cst_136 = arith.constant dense<0.000000e+00> : vector<8x16xf32>
      %160 = tpu.matmul %129, %159, %cst_136 {dimension_numbers = #tpu.dot_dimension_numbers<[1], [0], [0], [1], [0, 0, 1, 1], [], []>} : vector<8x32xbf16>, vector<32x16xbf16>, vector<8x16xf32> -> vector<8x16xf32>
      %161 = arith.truncf %160 : vector<8x16xf32> to vector<8x16xbf16>
      %c0_137 = arith.constant 0 : index
      %c2_138 = arith.constant 2 : index
      %c0_139 = arith.constant 0 : index
      %c0_140 = arith.constant 0 : index
      %162 = vector.load %arg11[%c0_137, %c2_138, %c0_139, %c0_140] : memref<2x4x8x16xbf16, #tpu.memory_space<vmem>>, vector<1x1x8x16xbf16>
      %163 = vector.shape_cast %162 : vector<1x1x8x16xbf16> to vector<8x16xbf16>
      %164 = vector.shape_cast %161 : vector<8x16xbf16> to vector<1x1x8x16xbf16>
      tpu.vector_store %arg11[%c0_137, %c2_138, %c0_139, %c0_140], %164 {strides = array<i32>} : memref<2x4x8x16xbf16, #tpu.memory_space<vmem>>, vector<1x1x8x16xbf16>,
      %c2_141 = arith.constant 2 : index
      %c0_142 = arith.constant 0 : index
      %c0_143 = arith.constant 0 : index
      %165 = vector.load %arg6[%c2_141, %c0_142, %c0_143] : memref<4x32x16xbf16, #tpu.memory_space<vmem>>, vector<1x32x16xbf16>
      %166 = vector.shape_cast %165 : vector<1x32x16xbf16> to vector<32x16xbf16>
      %cst_144 = arith.constant dense<0.000000e+00> : vector<8x16xf32>
      %167 = tpu.matmul %129, %166, %cst_144 {dimension_numbers = #tpu.dot_dimension_numbers<[1], [0], [0], [1], [0, 0, 1, 1], [], []>} : vector<8x32xbf16>, vector<32x16xbf16>, vector<8x16xf32> -> vector<8x16xf32>
      %168 = arith.truncf %167 : vector<8x16xf32> to vector<8x16xbf16>
      %c1_145 = arith.constant 1 : index
      %c2_146 = arith.constant 2 : index
      %c0_147 = arith.constant 0 : index
      %c0_148 = arith.constant 0 : index
      %169 = vector.load %arg11[%c1_145, %c2_146, %c0_147, %c0_148] : memref<2x4x8x16xbf16, #tpu.memory_space<vmem>>, vector<1x1x8x16xbf16>
      %170 = vector.shape_cast %169 : vector<1x1x8x16xbf16> to vector<8x16xbf16>
      %171 = vector.shape_cast %168 : vector<8x16xbf16> to vector<1x1x8x16xbf16>
      tpu.vector_store %arg11[%c1_145, %c2_146, %c0_147, %c0_148], %171 {strides = array<i32>} : memref<2x4x8x16xbf16, #tpu.memory_space<vmem>>, vector<1x1x8x16xbf16>,
      %c3_149 = arith.constant 3 : index
      %c0_150 = arith.constant 0 : index
      %c0_151 = arith.constant 0 : index
      %172 = vector.load %arg5[%c3_149, %c0_150, %c0_151] : memref<4x32x16xbf16, #tpu.memory_space<vmem>>, vector<1x32x16xbf16>
      %173 = vector.shape_cast %172 : vector<1x32x16xbf16> to vector<32x16xbf16>
      %cst_152 = arith.constant dense<0.000000e+00> : vector<8x16xf32>
      %174 = tpu.matmul %129, %173, %cst_152 {dimension_numbers = #tpu.dot_dimension_numbers<[1], [0], [0], [1], [0, 0, 1, 1], [], []>} : vector<8x32xbf16>, vector<32x16xbf16>, vector<8x16xf32> -> vector<8x16xf32>
      %175 = arith.truncf %174 : vector<8x16xf32> to vector<8x16xbf16>
      %c0_153 = arith.constant 0 : index
      %c3_154 = arith.constant 3 : index
      %c0_155 = arith.constant 0 : index
      %c0_156 = arith.constant 0 : index
      %176 = vector.load %arg11[%c0_153, %c3_154, %c0_155, %c0_156] : memref<2x4x8x16xbf16, #tpu.memory_space<vmem>>, vector<1x1x8x16xbf16>
      %177 = vector.shape_cast %176 : vector<1x1x8x16xbf16> to vector<8x16xbf16>
      %178 = vector.shape_cast %175 : vector<8x16xbf16> to vector<1x1x8x16xbf16>
      tpu.vector_store %arg11[%c0_153, %c3_154, %c0_155, %c0_156], %178 {strides = array<i32>} : memref<2x4x8x16xbf16, #tpu.memory_space<vmem>>, vector<1x1x8x16xbf16>,
      %c3_157 = arith.constant 3 : index
      %c0_158 = arith.constant 0 : index
      %c0_159 = arith.constant 0 : index
      %179 = vector.load %arg6[%c3_157, %c0_158, %c0_159] : memref<4x32x16xbf16, #tpu.memory_space<vmem>>, vector<1x32x16xbf16>
      %180 = vector.shape_cast %179 : vector<1x32x16xbf16> to vector<32x16xbf16>
      %cst_160 = arith.constant dense<0.000000e+00> : vector<8x16xf32>
      %181 = tpu.matmul %129, %180, %cst_160 {dimension_numbers = #tpu.dot_dimension_numbers<[1], [0], [0], [1], [0, 0, 1, 1], [], []>} : vector<8x32xbf16>, vector<32x16xbf16>, vector<8x16xf32> -> vector<8x16xf32>
      %182 = arith.truncf %181 : vector<8x16xf32> to vector<8x16xbf16>
      %c1_161 = arith.constant 1 : index
      %c3_162 = arith.constant 3 : index
      %c0_163 = arith.constant 0 : index
      %c0_164 = arith.constant 0 : index
      %183 = vector.load %arg11[%c1_161, %c3_162, %c0_163, %c0_164] : memref<2x4x8x16xbf16, #tpu.memory_space<vmem>>, vector<1x1x8x16xbf16>
      %184 = vector.shape_cast %183 : vector<1x1x8x16xbf16> to vector<8x16xbf16>
      %185 = vector.shape_cast %182 : vector<8x16xbf16> to vector<1x1x8x16xbf16>
      tpu.vector_store %arg11[%c1_161, %c3_162, %c0_163, %c0_164], %185 {strides = array<i32>} : memref<2x4x8x16xbf16, #tpu.memory_space<vmem>>, vector<1x1x8x16xbf16>,
    } else {
    }
    %c0 = arith.constant 0 : index
    %c0_1 = arith.constant 0 : index
    %c0_2 = arith.constant 0 : index
    %3 = vector.load %arg2[%c0, %c0_1, %c0_2] : memref<1x8x32xf32, #tpu.memory_space<vmem>>, vector<1x8x32xf32>
    %4 = vector.shape_cast %3 : vector<1x8x32xf32> to vector<8x32xf32>
    %5 = arith.truncf %4 : vector<8x32xf32> to vector<8x32xbf16>
    %c0_3 = arith.constant 0 : index
    %c0_4 = arith.constant 0 : index
    %c0_5 = arith.constant 0 : index
    %6 = vector.load %arg4[%c0_3, %c0_4, %c0_5] : memref<4x32x16xbf16, #tpu.memory_space<vmem>>, vector<1x32x16xbf16>
    %7 = vector.shape_cast %6 : vector<1x32x16xbf16> to vector<32x16xbf16>
    %cst = arith.constant dense<0.000000e+00> : vector<8x16xf32>
    %8 = tpu.matmul %5, %7, %cst {dimension_numbers = #tpu.dot_dimension_numbers<[1], [0], [0], [1], [0, 0, 1, 1], [], []>} : vector<8x32xbf16>, vector<32x16xbf16>, vector<8x16xf32> -> vector<8x16xf32>
    %cst_6 = arith.constant 2.500000e-01 : f32
    %9 = vector.broadcast %cst_6 : f32 to vector<8x16xf32>
    %10 = arith.mulf %8, %9 : vector<8x16xf32>
    %11 = arith.truncf %10 : vector<8x16xf32> to vector<8x16xbf16>
    %c0_7 = arith.constant 0 : index
    %c0_8 = arith.constant 0 : index
    %c0_9 = arith.constant 0 : index
    %c0_10 = arith.constant 0 : index
    %12 = vector.load %arg11[%c0_7, %c0_8, %c0_9, %c0_10] : memref<2x4x8x16xbf16, #tpu.memory_space<vmem>>, vector<1x1x8x16xbf16>
    %13 = vector.shape_cast %12 : vector<1x1x8x16xbf16> to vector<8x16xbf16>
    %c1 = arith.constant 1 : index
    %c0_11 = arith.constant 0 : index
    %c0_12 = arith.constant 0 : index
    %c0_13 = arith.constant 0 : index
    %14 = vector.load %arg11[%c1, %c0_11, %c0_12, %c0_13] : memref<2x4x8x16xbf16, #tpu.memory_space<vmem>>, vector<1x1x8x16xbf16>
    %15 = vector.shape_cast %14 : vector<1x1x8x16xbf16> to vector<8x16xbf16>
    %cst_14 = arith.constant dense<0.000000e+00> : vector<8x8xf32>
    %16 = tpu.matmul %11, %13, %cst_14 {dimension_numbers = #tpu.dot_dimension_numbers<[1], [1], [0], [0], [0, 0, 1, 0], [], []>} : vector<8x16xbf16>, vector<8x16xbf16>, vector<8x8xf32> -> vector<8x8xf32>
    %cst_15 = arith.constant dense<0xFF800000> : vector<8xf32>
    %17 = vector.multi_reduction <maximumf>, %16, %cst_15 [1] : vector<8x8xf32> to vector<8xf32>
    %18 = vector.shape_cast %17 : vector<8xf32> to vector<8x1xf32>
    %19 = vector.broadcast %18 : vector<8x1xf32> to vector<8x8xf32>
    %20 = arith.subf %16, %19 : vector<8x8xf32>
    %21 = math.exp %20 : vector<8x8xf32>
    %cst_16 = arith.constant dense<0.000000e+00> : vector<8xf32>
    %22 = vector.multi_reduction <add>, %21, %cst_16 [1] : vector<8x8xf32> to vector<8xf32>
    %23 = vector.shape_cast %22 : vector<8xf32> to vector<8x1xf32>
    %24 = tpu.reciprocal %23 {approx = true} : vector<8x1xf32> -> vector<8x1xf32>
    %25 = vector.broadcast %24 : vector<8x1xf32> to vector<8x8xf32>
    %26 = arith.mulf %21, %25 : vector<8x8xf32>
    %c0_17 = arith.constant 0 : index
    %c0_18 = arith.constant 0 : index
    %c0_19 = arith.constant 0 : index
    %c0_20 = arith.constant 0 : index
    %27 = vector.load %arg10[%c0_17, %c0_18, %c0_19, %c0_20] : memref<1x4x8x8xf32, #tpu.memory_space<vmem>>, vector<1x1x8x8xf32>
    %28 = vector.shape_cast %27 : vector<1x1x8x8xf32> to vector<8x8xf32>
    %29 = vector.shape_cast %26 : vector<8x8xf32> to vector<1x1x8x8xf32>
    tpu.vector_store %arg10[%c0_17, %c0_18, %c0_19, %c0_20], %29 {strides = array<i32>} : memref<1x4x8x8xf32, #tpu.memory_space<vmem>>, vector<1x1x8x8xf32>,
    %30 = arith.truncf %26 : vector<8x8xf32> to vector<8x8xbf16>
    %cst_21 = arith.constant dense<0.000000e+00> : vector<8x16xf32>
    %31 = tpu.matmul %30, %15, %cst_21 {dimension_numbers = #tpu.dot_dimension_numbers<[1], [0], [0], [1], [0, 0, 1, 1], [], []>} : vector<8x8xbf16>, vector<8x16xbf16>, vector<8x16xf32> -> vector<8x16xf32>
    %32 = arith.truncf %31 : vector<8x16xf32> to vector<8x16xbf16>
    %c0_22 = arith.constant 0 : index
    %c0_23 = arith.constant 0 : index
    %33 = vector.load %arg12[%c0_22, %c0_23] : memref<8x64xbf16, #tpu.memory_space<vmem>>, vector<8x16xbf16>
    tpu.vector_store %arg12[%c0_22, %c0_23], %32 {strides = array<i32>} : memref<8x64xbf16, #tpu.memory_space<vmem>>, vector<8x16xbf16>,
    %c1_24 = arith.constant 1 : index
    %c0_25 = arith.constant 0 : index
    %c0_26 = arith.constant 0 : index
    %34 = vector.load %arg4[%c1_24, %c0_25, %c0_26] : memref<4x32x16xbf16, #tpu.memory_space<vmem>>, vector<1x32x16xbf16>
    %35 = vector.shape_cast %34 : vector<1x32x16xbf16> to vector<32x16xbf16>
    %cst_27 = arith.constant dense<0.000000e+00> : vector<8x16xf32>
    %36 = tpu.matmul %5, %35, %cst_27 {dimension_numbers = #tpu.dot_dimension_numbers<[1], [0], [0], [1], [0, 0, 1, 1], [], []>} : vector<8x32xbf16>, vector<32x16xbf16>, vector<8x16xf32> -> vector<8x16xf32>
    %cst_28 = arith.constant 2.500000e-01 : f32
    %37 = vector.broadcast %cst_28 : f32 to vector<8x16xf32>
    %38 = arith.mulf %36, %37 : vector<8x16xf32>
    %39 = arith.truncf %38 : vector<8x16xf32> to vector<8x16xbf16>
    %c0_29 = arith.constant 0 : index
    %c1_30 = arith.constant 1 : index
    %c0_31 = arith.constant 0 : index
    %c0_32 = arith.constant 0 : index
    %40 = vector.load %arg11[%c0_29, %c1_30, %c0_31, %c0_32] : memref<2x4x8x16xbf16, #tpu.memory_space<vmem>>, vector<1x1x8x16xbf16>
    %41 = vector.shape_cast %40 : vector<1x1x8x16xbf16> to vector<8x16xbf16>
    %c1_33 = arith.constant 1 : index
    %c1_34 = arith.constant 1 : index
    %c0_35 = arith.constant 0 : index
    %c0_36 = arith.constant 0 : index
    %42 = vector.load %arg11[%c1_33, %c1_34, %c0_35, %c0_36] : memref<2x4x8x16xbf16, #tpu.memory_space<vmem>>, vector<1x1x8x16xbf16>
    %43 = vector.shape_cast %42 : vector<1x1x8x16xbf16> to vector<8x16xbf16>
    %cst_37 = arith.constant dense<0.000000e+00> : vector<8x8xf32>
    %44 = tpu.matmul %39, %41, %cst_37 {dimension_numbers = #tpu.dot_dimension_numbers<[1], [1], [0], [0], [0, 0, 1, 0], [], []>} : vector<8x16xbf16>, vector<8x16xbf16>, vector<8x8xf32> -> vector<8x8xf32>
    %cst_38 = arith.constant dense<0xFF800000> : vector<8xf32>
    %45 = vector.multi_reduction <maximumf>, %44, %cst_38 [1] : vector<8x8xf32> to vector<8xf32>
    %46 = vector.shape_cast %45 : vector<8xf32> to vector<8x1xf32>
    %47 = vector.broadcast %46 : vector<8x1xf32> to vector<8x8xf32>
    %48 = arith.subf %44, %47 : vector<8x8xf32>
    %49 = math.exp %48 : vector<8x8xf32>
    %cst_39 = arith.constant dense<0.000000e+00> : vector<8xf32>
    %50 = vector.multi_reduction <add>, %49, %cst_39 [1] : vector<8x8xf32> to vector<8xf32>
    %51 = vector.shape_cast %50 : vector<8xf32> to vector<8x1xf32>
    %52 = tpu.reciprocal %51 {approx = true} : vector<8x1xf32> -> vector<8x1xf32>
    %53 = vector.broadcast %52 : vector<8x1xf32> to vector<8x8xf32>
    %54 = arith.mulf %49, %53 : vector<8x8xf32>
    %c0_40 = arith.constant 0 : index
    %c1_41 = arith.constant 1 : index
    %c0_42 = arith.constant 0 : index
    %c0_43 = arith.constant 0 : index
    %55 = vector.load %arg10[%c0_40, %c1_41, %c0_42, %c0_43] : memref<1x4x8x8xf32, #tpu.memory_space<vmem>>, vector<1x1x8x8xf32>
    %56 = vector.shape_cast %55 : vector<1x1x8x8xf32> to vector<8x8xf32>
    %57 = vector.shape_cast %54 : vector<8x8xf32> to vector<1x1x8x8xf32>
    tpu.vector_store %arg10[%c0_40, %c1_41, %c0_42, %c0_43], %57 {strides = array<i32>} : memref<1x4x8x8xf32, #tpu.memory_space<vmem>>, vector<1x1x8x8xf32>,
    %58 = arith.truncf %54 : vector<8x8xf32> to vector<8x8xbf16>
    %cst_44 = arith.constant dense<0.000000e+00> : vector<8x16xf32>
    %59 = tpu.matmul %58, %43, %cst_44 {dimension_numbers = #tpu.dot_dimension_numbers<[1], [0], [0], [1], [0, 0, 1, 1], [], []>} : vector<8x8xbf16>, vector<8x16xbf16>, vector<8x16xf32> -> vector<8x16xf32>
    %60 = arith.truncf %59 : vector<8x16xf32> to vector<8x16xbf16>
    %c0_45 = arith.constant 0 : index
    %c16 = arith.constant 16 : index
    %61 = vector.load %arg12[%c0_45, %c16] : memref<8x64xbf16, #tpu.memory_space<vmem>>, vector<8x16xbf16>
    tpu.vector_store %arg12[%c0_45, %c16], %60 {strides = array<i32>} : memref<8x64xbf16, #tpu.memory_space<vmem>>, vector<8x16xbf16>,
    %c2 = arith.constant 2 : index
    %c0_46 = arith.constant 0 : index
    %c0_47 = arith.constant 0 : index
    %62 = vector.load %arg4[%c2, %c0_46, %c0_47] : memref<4x32x16xbf16, #tpu.memory_space<vmem>>, vector<1x32x16xbf16>
    %63 = vector.shape_cast %62 : vector<1x32x16xbf16> to vector<32x16xbf16>
    %cst_48 = arith.constant dense<0.000000e+00> : vector<8x16xf32>
    %64 = tpu.matmul %5, %63, %cst_48 {dimension_numbers = #tpu.dot_dimension_numbers<[1], [0], [0], [1], [0, 0, 1, 1], [], []>} : vector<8x32xbf16>, vector<32x16xbf16>, vector<8x16xf32> -> vector<8x16xf32>
    %cst_49 = arith.constant 2.500000e-01 : f32
    %65 = vector.broadcast %cst_49 : f32 to vector<8x16xf32>
    %66 = arith.mulf %64, %65 : vector<8x16xf32>
    %67 = arith.truncf %66 : vector<8x16xf32> to vector<8x16xbf16>
    %c0_50 = arith.constant 0 : index
    %c2_51 = arith.constant 2 : index
    %c0_52 = arith.constant 0 : index
    %c0_53 = arith.constant 0 : index
    %68 = vector.load %arg11[%c0_50, %c2_51, %c0_52, %c0_53] : memref<2x4x8x16xbf16, #tpu.memory_space<vmem>>, vector<1x1x8x16xbf16>
    %69 = vector.shape_cast %68 : vector<1x1x8x16xbf16> to vector<8x16xbf16>
    %c1_54 = arith.constant 1 : index
    %c2_55 = arith.constant 2 : index
    %c0_56 = arith.constant 0 : index
    %c0_57 = arith.constant 0 : index
    %70 = vector.load %arg11[%c1_54, %c2_55, %c0_56, %c0_57] : memref<2x4x8x16xbf16, #tpu.memory_space<vmem>>, vector<1x1x8x16xbf16>
    %71 = vector.shape_cast %70 : vector<1x1x8x16xbf16> to vector<8x16xbf16>
    %cst_58 = arith.constant dense<0.000000e+00> : vector<8x8xf32>
    %72 = tpu.matmul %67, %69, %cst_58 {dimension_numbers = #tpu.dot_dimension_numbers<[1], [1], [0], [0], [0, 0, 1, 0], [], []>} : vector<8x16xbf16>, vector<8x16xbf16>, vector<8x8xf32> -> vector<8x8xf32>
    %cst_59 = arith.constant dense<0xFF800000> : vector<8xf32>
    %73 = vector.multi_reduction <maximumf>, %72, %cst_59 [1] : vector<8x8xf32> to vector<8xf32>
    %74 = vector.shape_cast %73 : vector<8xf32> to vector<8x1xf32>
    %75 = vector.broadcast %74 : vector<8x1xf32> to vector<8x8xf32>
    %76 = arith.subf %72, %75 : vector<8x8xf32>
    %77 = math.exp %76 : vector<8x8xf32>
    %cst_60 = arith.constant dense<0.000000e+00> : vector<8xf32>
    %78 = vector.multi_reduction <add>, %77, %cst_60 [1] : vector<8x8xf32> to vector<8xf32>
    %79 = vector.shape_cast %78 : vector<8xf32> to vector<8x1xf32>
    %80 = tpu.reciprocal %79 {approx = true} : vector<8x1xf32> -> vector<8x1xf32>
    %81 = vector.broadcast %80 : vector<8x1xf32> to vector<8x8xf32>
    %82 = arith.mulf %77, %81 : vector<8x8xf32>
    %c0_61 = arith.constant 0 : index
    %c2_62 = arith.constant 2 : index
    %c0_63 = arith.constant 0 : index
    %c0_64 = arith.constant 0 : index
    %83 = vector.load %arg10[%c0_61, %c2_62, %c0_63, %c0_64] : memref<1x4x8x8xf32, #tpu.memory_space<vmem>>, vector<1x1x8x8xf32>
    %84 = vector.shape_cast %83 : vector<1x1x8x8xf32> to vector<8x8xf32>
    %85 = vector.shape_cast %82 : vector<8x8xf32> to vector<1x1x8x8xf32>
    tpu.vector_store %arg10[%c0_61, %c2_62, %c0_63, %c0_64], %85 {strides = array<i32>} : memref<1x4x8x8xf32, #tpu.memory_space<vmem>>, vector<1x1x8x8xf32>,
    %86 = arith.truncf %82 : vector<8x8xf32> to vector<8x8xbf16>
    %cst_65 = arith.constant dense<0.000000e+00> : vector<8x16xf32>
    %87 = tpu.matmul %86, %71, %cst_65 {dimension_numbers = #tpu.dot_dimension_numbers<[1], [0], [0], [1], [0, 0, 1, 1], [], []>} : vector<8x8xbf16>, vector<8x16xbf16>, vector<8x16xf32> -> vector<8x16xf32>
    %88 = arith.truncf %87 : vector<8x16xf32> to vector<8x16xbf16>
    %c0_66 = arith.constant 0 : index
    %c32 = arith.constant 32 : index
    %89 = vector.load %arg12[%c0_66, %c32] : memref<8x64xbf16, #tpu.memory_space<vmem>>, vector<8x16xbf16>
    tpu.vector_store %arg12[%c0_66, %c32], %88 {strides = array<i32>} : memref<8x64xbf16, #tpu.memory_space<vmem>>, vector<8x16xbf16>,
    %c3 = arith.constant 3 : index
    %c0_67 = arith.constant 0 : index
    %c0_68 = arith.constant 0 : index
    %90 = vector.load %arg4[%c3, %c0_67, %c0_68] : memref<4x32x16xbf16, #tpu.memory_space<vmem>>, vector<1x32x16xbf16>
    %91 = vector.shape_cast %90 : vector<1x32x16xbf16> to vector<32x16xbf16>
    %cst_69 = arith.constant dense<0.000000e+00> : vector<8x16xf32>
    %92 = tpu.matmul %5, %91, %cst_69 {dimension_numbers = #tpu.dot_dimension_numbers<[1], [0], [0], [1], [0, 0, 1, 1], [], []>} : vector<8x32xbf16>, vector<32x16xbf16>, vector<8x16xf32> -> vector<8x16xf32>
    %cst_70 = arith.constant 2.500000e-01 : f32
    %93 = vector.broadcast %cst_70 : f32 to vector<8x16xf32>
    %94 = arith.mulf %92, %93 : vector<8x16xf32>
    %95 = arith.truncf %94 : vector<8x16xf32> to vector<8x16xbf16>
    %c0_71 = arith.constant 0 : index
    %c3_72 = arith.constant 3 : index
    %c0_73 = arith.constant 0 : index
    %c0_74 = arith.constant 0 : index
    %96 = vector.load %arg11[%c0_71, %c3_72, %c0_73, %c0_74] : memref<2x4x8x16xbf16, #tpu.memory_space<vmem>>, vector<1x1x8x16xbf16>
    %97 = vector.shape_cast %96 : vector<1x1x8x16xbf16> to vector<8x16xbf16>
    %c1_75 = arith.constant 1 : index
    %c3_76 = arith.constant 3 : index
    %c0_77 = arith.constant 0 : index
    %c0_78 = arith.constant 0 : index
    %98 = vector.load %arg11[%c1_75, %c3_76, %c0_77, %c0_78] : memref<2x4x8x16xbf16, #tpu.memory_space<vmem>>, vector<1x1x8x16xbf16>
    %99 = vector.shape_cast %98 : vector<1x1x8x16xbf16> to vector<8x16xbf16>
    %cst_79 = arith.constant dense<0.000000e+00> : vector<8x8xf32>
    %100 = tpu.matmul %95, %97, %cst_79 {dimension_numbers = #tpu.dot_dimension_numbers<[1], [1], [0], [0], [0, 0, 1, 0], [], []>} : vector<8x16xbf16>, vector<8x16xbf16>, vector<8x8xf32> -> vector<8x8xf32>
    %cst_80 = arith.constant dense<0xFF800000> : vector<8xf32>
    %101 = vector.multi_reduction <maximumf>, %100, %cst_80 [1] : vector<8x8xf32> to vector<8xf32>
    %102 = vector.shape_cast %101 : vector<8xf32> to vector<8x1xf32>
    %103 = vector.broadcast %102 : vector<8x1xf32> to vector<8x8xf32>
    %104 = arith.subf %100, %103 : vector<8x8xf32>
    %105 = math.exp %104 : vector<8x8xf32>
    %cst_81 = arith.constant dense<0.000000e+00> : vector<8xf32>
    %106 = vector.multi_reduction <add>, %105, %cst_81 [1] : vector<8x8xf32> to vector<8xf32>
    %107 = vector.shape_cast %106 : vector<8xf32> to vector<8x1xf32>
    %108 = tpu.reciprocal %107 {approx = true} : vector<8x1xf32> -> vector<8x1xf32>
    %109 = vector.broadcast %108 : vector<8x1xf32> to vector<8x8xf32>
    %110 = arith.mulf %105, %109 : vector<8x8xf32>
    %c0_82 = arith.constant 0 : index
    %c3_83 = arith.constant 3 : index
    %c0_84 = arith.constant 0 : index
    %c0_85 = arith.constant 0 : index
    %111 = vector.load %arg10[%c0_82, %c3_83, %c0_84, %c0_85] : memref<1x4x8x8xf32, #tpu.memory_space<vmem>>, vector<1x1x8x8xf32>
    %112 = vector.shape_cast %111 : vector<1x1x8x8xf32> to vector<8x8xf32>
    %113 = vector.shape_cast %110 : vector<8x8xf32> to vector<1x1x8x8xf32>
    tpu.vector_store %arg10[%c0_82, %c3_83, %c0_84, %c0_85], %113 {strides = array<i32>} : memref<1x4x8x8xf32, #tpu.memory_space<vmem>>, vector<1x1x8x8xf32>,
    %114 = arith.truncf %110 : vector<8x8xf32> to vector<8x8xbf16>
    %cst_86 = arith.constant dense<0.000000e+00> : vector<8x16xf32>
    %115 = tpu.matmul %114, %99, %cst_86 {dimension_numbers = #tpu.dot_dimension_numbers<[1], [0], [0], [1], [0, 0, 1, 1], [], []>} : vector<8x8xbf16>, vector<8x16xbf16>, vector<8x16xf32> -> vector<8x16xf32>
    %116 = arith.truncf %115 : vector<8x16xf32> to vector<8x16xbf16>
    %c0_87 = arith.constant 0 : index
    %c48 = arith.constant 48 : index
    %117 = vector.load %arg12[%c0_87, %c48] : memref<8x64xbf16, #tpu.memory_space<vmem>>, vector<8x16xbf16>
    tpu.vector_store %arg12[%c0_87, %c48], %116 {strides = array<i32>} : memref<8x64xbf16, #tpu.memory_space<vmem>>, vector<8x16xbf16>,
    %c0_88 = arith.constant 0 : index
    %c0_89 = arith.constant 0 : index
    %118 = vector.load %arg12[%c0_88, %c0_89] : memref<8x64xbf16, #tpu.memory_space<vmem>>, vector<8x64xbf16>
    %c0_90 = arith.constant 0 : index
    %c0_91 = arith.constant 0 : index
    %119 = vector.load %arg7[%c0_90, %c0_91] : memref<64x32xbf16, #tpu.memory_space<vmem>>, vector<64x32xbf16>
    %cst_92 = arith.constant dense<0.000000e+00> : vector<8x32xf32>
    %120 = tpu.matmul %118, %119, %cst_92 {dimension_numbers = #tpu.dot_dimension_numbers<[1], [0], [0], [1], [0, 0, 1, 1], [], []>} : vector<8x64xbf16>, vector<64x32xbf16>, vector<8x32xf32> -> vector<8x32xf32>
    %c0_93 = arith.constant 0 : index
    %c0_94 = arith.constant 0 : index
    %121 = vector.load %arg8[%c0_93, %c0_94] : memref<1x32xf32, #tpu.memory_space<vmem>>, vector<1x32xf32>
    %122 = vector.broadcast %121 : vector<1x32xf32> to vector<8x32xf32>
    %123 = arith.addf %120, %122 : vector<8x32xf32>
    %c0_95 = arith.constant 0 : index
    %c0_96 = arith.constant 0 : index
    %c0_97 = arith.constant 0 : index
    %124 = vector.load %arg9[%c0_95, %c0_96, %c0_97] : memref<1x8x32xf32, #tpu.memory_space<vmem>>, vector<1x8x32xf32>
    %125 = vector.shape_cast %124 : vector<1x8x32xf32> to vector<8x32xf32>
    %126 = vector.shape_cast %123 : vector<8x32xf32> to vector<1x8x32xf32>
    tpu.vector_store %arg9[%c0_95, %c0_96, %c0_97], %126 {strides = array<i32>} : memref<1x8x32xf32, #tpu.memory_space<vmem>>, vector<1x8x32xf32>,
    return
  }
  func.func @transform_0(%arg0: i32, %arg1: i32) -> (i32, i32, i32) {
    %c0_i32 = arith.constant 0 : i32
    %c0_i32_0 = arith.constant 0 : i32
    return %arg0, %arg1, %c0_i32 : i32, i32, i32
  }
  func.func @transform_1(%arg0: i32, %arg1: i32) -> (i32, i32, i32) {
    %c0_i32 = arith.constant 0 : i32
    %c0_i32_0 = arith.constant 0 : i32
    %c0_i32_1 = arith.constant 0 : i32
    return %arg0, %c0_i32, %c0_i32_0 : i32, i32, i32
  }
  func.func @transform_2(%arg0: i32, %arg1: i32) -> (i32, i32, i32) {
    %c0_i32 = arith.constant 0 : i32
    %c0_i32_0 = arith.constant 0 : i32
    %c0_i32_1 = arith.constant 0 : i32
    %c0_i32_2 = arith.constant 0 : i32
    return %c0_i32, %c0_i32_0, %c0_i32_1 : i32, i32, i32
  }
  func.func @transform_3(%arg0: i32, %arg1: i32) -> (i32, i32, i32) {
    %c0_i32 = arith.constant 0 : i32
    %c0_i32_0 = arith.constant 0 : i32
    %c0_i32_1 = arith.constant 0 : i32
    %c0_i32_2 = arith.constant 0 : i32
    return %c0_i32, %c0_i32_0, %c0_i32_1 : i32, i32, i32
  }
  func.func @transform_4(%arg0: i32, %arg1: i32) -> (i32, i32, i32) {
    %c0_i32 = arith.constant 0 : i32
    %c0_i32_0 = arith.constant 0 : i32
    %c0_i32_1 = arith.constant 0 : i32
    %c0_i32_2 = arith.constant 0 : i32
    return %c0_i32, %c0_i32_0, %c0_i32_1 : i32, i32, i32
  }
  func.func @transform_5(%arg0: i32, %arg1: i32) -> (i32, i32) {
    %c0_i32 = arith.constant 0 : i32
    %c0_i32_0 = arith.constant 0 : i32
    %c0_i32_1 = arith.constant 0 : i32
    return %c0_i32, %c0_i32_0 : i32, i32
  }
  func.func @transform_6(%arg0: i32, %arg1: i32) -> (i32, i32) {
    %c0_i32 = arith.constant 0 : i32
    %c0_i32_0 = arith.constant 0 : i32
    %c0_i32_1 = arith.constant 0 : i32
    return %c0_i32, %c0_i32_0 : i32, i32
  }
  func.func @transform_7(%arg0: i32, %arg1: i32) -> (i32, i32, i32) {
    %c0_i32 = arith.constant 0 : i32
    %c0_i32_0 = arith.constant 0 : i32
    return %arg0, %arg1, %c0_i32 : i32, i32, i32
  }
  func.func @transform_8(%arg0: i32, %arg1: i32) -> (i32, i32, i32, i32) {
    %c0_i32 = arith.constant 0 : i32
    %c0_i32_0 = arith.constant 0 : i32
    %c0_i32_1 = arith.constant 0 : i32
    return %arg0, %c0_i32, %arg1, %c0_i32_0 : i32, i32, i32, i32
  }
}

</mosaic_0001>

<llo_original>
// kernel: tpu_custom_call.1
$region0: #{tpu_custom_call.1}
  #allocation0 [shape = 'u32[]', space=smem, size = 0x4, offset = 0x4, fixed_abs, tag = 'smem constant byte address 0x4 - core index']
  #allocation1 [shape = 'u32[144,128]{1,0:T(1,128)}', space=vmem, size = 0x12000, scoped, tag = 'internal scratch']
  #allocation2 [shape = 'bf16[2,4,8,16]{3,2,1,0:T(8,128)(2,1)}', space=vmem, size = 0x4000, scoped, tag = 'scratch operand']
  #allocation3 [shape = 'bf16[8,64]{1,0:T(8,128)(2,1)}', space=vmem, size = 0x800, scoped, tag = 'scratch operand']
  %s0 = inlined_call_operand.vmem [shape: f32[2,8,32], index: 0, kind: input, shape index: {}]
  %s1 = inlined_call_operand.vmem [shape: f32[2,8,32], index: 1, kind: input, shape index: {}]
  %s2 = inlined_call_operand.vmem [shape: bf16[4,32,16], index: 2, kind: input, shape index: {}]
  %s3 = inlined_call_operand.vmem [shape: bf16[4,32,16], index: 3, kind: input, shape index: {}]
  %s4 = inlined_call_operand.vmem [shape: bf16[4,32,16], index: 4, kind: input, shape index: {}]
  %s5 = inlined_call_operand.vmem [shape: bf16[64,32], index: 5, kind: input, shape index: {}]
  %s6 = inlined_call_operand.vmem [shape: f32[1,32], index: 6, kind: input, shape index: {}]
  %s7 = inlined_call_operand.hbm [shape: f32[2,8,32], index: 7, kind: output, shape index: {0}]
  %s8 = inlined_call_operand.hbm [shape: f32[2,4,8,8], index: 8, kind: output, shape index: {1}]
  %9 = xla_tuple %s7, %s8
  %s10 = sld [smem:[#allocation0]]
  $region73: #{tpu_custom_call.1} parent=0
    _
  %s12 = ssub.s32 1, %s10
  %s13 = scalar_select 0, %s12, %s10
  $region1: #{tpu_custom_call.1} parent=0
    #allocation4 [shape = 'u8[8192]{0}', space=vmem, size = 0x2000, scoped, tag = 'output window, operand 0']
    #allocation5 [shape = 's32[2]{0}', space=sflag, size = 0x8, scoped, tag = 'scoped memory for tpu_custom_call.1']
    #allocation6 [shape = 'u8[32768]{0}', space=vmem, size = 0x8000, scoped, tag = 'output window, operand 1']
    #allocation7 [shape = 's32[2]{0}', space=sflag, size = 0x8, scoped, tag = 'scoped memory for tpu_custom_call.1']
    %14 = vsyncpa [#allocation5], 0
    %s15 = scalar_lea.sflag [#allocation5], 1
    %16 = vsyncpa %s15, 0
    %17 = vsyncpa [#allocation7], 0
    %s18 = scalar_lea.sflag [#allocation7], 1
    %19 = vsyncpa %s18, 0
    loop: start=0, step=1, limit=4
    $region2: #{tpu_custom_call.1} parent=1 // loop_pre_header
      _
    $region3: #{tpu_custom_call.1} parent=1 // loop_header
      %s21 = sphi 0, %s25
      %p22 = scmp.ge.s32.totalorder %s21, 4
      %s28 = sphi 0, %s40
      %s29 = sphi 0, %s36
      %s30 = sphi 0, %s28
      %s31 = sphi 0, %s29
      %s32 = sphi 0, %s30
      %s33 = sphi 0, %s31
      %s45 = sphi 0, %s47
      %s48 = sphi 0, %s45
      %s49 = sphi 0, %s48
      %s65 = sphi 0, %s49
      %s71 = sphi 0, %s73
      %s74 = sphi 0, %s71
      %s75 = sphi 0, %s74
      %s91 = sphi 0, %s75
      %s95 = sphi 0, %s95
      %s97 = sphi 0, %s95
      %s98 = sphi 0, %s97
      %s112 = sphi 0, %s98
      %s116 = sphi 0, %s116
      %s118 = sphi 0, %s116
      %s119 = sphi 0, %s118
      %s133 = sphi 0, %s119
      %s137 = sphi 0, %s137
      %s139 = sphi 0, %s137
      %s140 = sphi 0, %s139
      %s154 = sphi 0, %s140
      %s158 = sphi 0, %s158
      %s160 = sphi 0, %s158
      %s161 = sphi 0, %s160
      %s175 = sphi 0, %s161
      %s179 = sphi 0, %s179
      %s181 = sphi 0, %s179
      %s182 = sphi 0, %s181
      %s196 = sphi 0, %s182
      %s204 = sphi 0, %s206
      %s207 = sphi 0, %s204
      %s208 = sphi 0, %s207
      %s224 = sphi 0, %s208
      %s232 = sphi 0, %s234
      %s235 = sphi 0, %s232
      %s236 = sphi 0, %s235
      %s252 = sphi 0, %s236
    $region4: #{tpu_custom_call.1} parent=1 // loop_header_branch
      %24 = sbr.rel (%p22) target = $region8
    $region5: #{tpu_custom_call.1} parent=1 // loop_body
      %s26 = ssub.s32 %s21, 1
      %s27 = ssub.s32 %s21, 2
      %s34 = sadd.s32 1, %s29
      %p35 = scmp.ge.s32.totalorder %s34, 1
      %s36 = scalar_select %p35, 0, %s34
      %s37 = sadd.s32 1, %s28
      %s38 = scalar_select %p35, %s37, %s28
      %p39 = scmp.ge.s32.totalorder %s38, 2
      %s40 = scalar_select %p39, 0, %s38
      %s41 = ssub.s32 %s28, %s40
      %s42 = ssub.s32 %s29, %s36
      %s43 = sor.u32 %s41, %s42
      %p44 = scmp.eq.s32.totalorder %s43, 0
      %s46 = sadd.s32 %s45, 1
      %s47 = scalar_select %p44, %s45, %s46
      %p50 = pneg %p44
      %p51 = scmp.eq.s32.totalorder %s21, 1
      %p52 = por %p50, %p51
      %p53 = scmp.ne.s32.totalorder %s45, %s48
      %p54 = scmp.eq.s32.totalorder %s21, 0
      %p55 = por %p53, %p54
      %p56 = scmp.ne.s32.totalorder %s45, %s48
      %p57 = scmp.eq.s32.totalorder %s26, 1
      %p58 = por %p56, %p57
      %p59 = scmp.ne.s32.totalorder %s48, %s49
      %p60 = scmp.eq.s32.totalorder %s26, 0
      %p61 = por %p59, %p60
      %p62 = scmp.ne.s32.totalorder %s48, %s49
      %p63 = scmp.eq.s32.totalorder %s27, 1
      %p64 = por %p62, %p63
      %p66 = scmp.ne.s32.totalorder %s49, %s65
      %p67 = scmp.eq.s32.totalorder %s27, 0
      %p68 = por %p66, %p67
      %s69 = ssub.s32 %s28, %s40
      %p70 = scmp.eq.s32.totalorder %s69, 0
      %s72 = sadd.s32 %s71, 1
      %s73 = scalar_select %p70, %s71, %s72
      %p76 = pneg %p70
      %p77 = scmp.eq.s32.totalorder %s21, 1
      %p78 = por %p76, %p77
      %p79 = scmp.ne.s32.totalorder %s71, %s74
      %p80 = scmp.eq.s32.totalorder %s21, 0
      %p81 = por %p79, %p80
      %p82 = scmp.ne.s32.totalorder %s71, %s74
      %p83 = scmp.eq.s32.totalorder %s26, 1
      %p84 = por %p82, %p83
      %p85 = scmp.ne.s32.totalorder %s74, %s75
      %p86 = scmp.eq.s32.totalorder %s26, 0
      %p87 = por %p85, %p86
      %p88 = scmp.ne.s32.totalorder %s74, %s75
      %p89 = scmp.eq.s32.totalorder %s27, 1
      %p90 = por %p88, %p89
      %p92 = scmp.ne.s32.totalorder %s75, %s91
      %p93 = scmp.eq.s32.totalorder %s27, 0
      %p94 = por %p92, %p93
      %s96 = sadd.s32 %s95, 1
      %p99 = scmp.eq.s32.totalorder %s21, 1
      %p100 = scmp.ne.s32.totalorder %s95, %s97
      %p101 = scmp.eq.s32.totalorder %s21, 0
      %p102 = por %p100, %p101
      %p103 = scmp.ne.s32.totalorder %s95, %s97
      %p104 = scmp.eq.s32.totalorder %s26, 1
      %p105 = por %p103, %p104
      %p106 = scmp.ne.s32.totalorder %s97, %s98
      %p107 = scmp.eq.s32.totalorder %s26, 0
      %p108 = por %p106, %p107
      %p109 = scmp.ne.s32.totalorder %s97, %s98
      %p110 = scmp.eq.s32.totalorder %s27, 1
      %p111 = por %p109, %p110
      %p113 = scmp.ne.s32.totalorder %s98, %s112
      %p114 = scmp.eq.s32.totalorder %s27, 0
      %p115 = por %p113, %p114
      %s117 = sadd.s32 %s116, 1
      %p120 = scmp.eq.s32.totalorder %s21, 1
      %p121 = scmp.ne.s32.totalorder %s116, %s118
      %p122 = scmp.eq.s32.totalorder %s21, 0
      %p123 = por %p121, %p122
      %p124 = scmp.ne.s32.totalorder %s116, %s118
      %p125 = scmp.eq.s32.totalorder %s26, 1
      %p126 = por %p124, %p125
      %p127 = scmp.ne.s32.totalorder %s118, %s119
      %p128 = scmp.eq.s32.totalorder %s26, 0
      %p129 = por %p127, %p128
      %p130 = scmp.ne.s32.totalorder %s118, %s119
      %p131 = scmp.eq.s32.totalorder %s27, 1
      %p132 = por %p130, %p131
      %p134 = scmp.ne.s32.totalorder %s119, %s133
      %p135 = scmp.eq.s32.totalorder %s27, 0
      %p136 = por %p134, %p135
      %s138 = sadd.s32 %s137, 1
      %p141 = scmp.eq.s32.totalorder %s21, 1
      %p142 = scmp.ne.s32.totalorder %s137, %s139
      %p143 = scmp.eq.s32.totalorder %s21, 0
      %p144 = por %p142, %p143
      %p145 = scmp.ne.s32.totalorder %s137, %s139
      %p146 = scmp.eq.s32.totalorder %s26, 1
      %p147 = por %p145, %p146
      %p148 = scmp.ne.s32.totalorder %s139, %s140
      %p149 = scmp.eq.s32.totalorder %s26, 0
      %p150 = por %p148, %p149
      %p151 = scmp.ne.s32.totalorder %s139, %s140
      %p152 = scmp.eq.s32.totalorder %s27, 1
      %p153 = por %p151, %p152
      %p155 = scmp.ne.s32.totalorder %s140, %s154
      %p156 = scmp.eq.s32.totalorder %s27, 0
      %p157 = por %p155, %p156
      %s159 = sadd.s32 %s158, 1
      %p162 = scmp.eq.s32.totalorder %s21, 1
      %p163 = scmp.ne.s32.totalorder %s158, %s160
      %p164 = scmp.eq.s32.totalorder %s21, 0
      %p165 = por %p163, %p164
      %p166 = scmp.ne.s32.totalorder %s158, %s160
      %p167 = scmp.eq.s32.totalorder %s26, 1
      %p168 = por %p166, %p167
      %p169 = scmp.ne.s32.totalorder %s160, %s161
      %p170 = scmp.eq.s32.totalorder %s26, 0
      %p171 = por %p169, %p170
      %p172 = scmp.ne.s32.totalorder %s160, %s161
      %p173 = scmp.eq.s32.totalorder %s27, 1
      %p174 = por %p172, %p173
      %p176 = scmp.ne.s32.totalorder %s161, %s175
      %p177 = scmp.eq.s32.totalorder %s27, 0
      %p178 = por %p176, %p177
      %s180 = sadd.s32 %s179, 1
      %p183 = scmp.eq.s32.totalorder %s21, 1
      %p184 = scmp.ne.s32.totalorder %s179, %s181
      %p185 = scmp.eq.s32.totalorder %s21, 0
      %p186 = por %p184, %p185
      %p187 = scmp.ne.s32.totalorder %s179, %s181
      %p188 = scmp.eq.s32.totalorder %s26, 1
      %p189 = por %p187, %p188
      %p190 = scmp.ne.s32.totalorder %s181, %s182
      %p191 = scmp.eq.s32.totalorder %s26, 0
      %p192 = por %p190, %p191
      %p193 = scmp.ne.s32.totalorder %s181, %s182
      %p194 = scmp.eq.s32.totalorder %s27, 1
      %p195 = por %p193, %p194
      %p197 = scmp.ne.s32.totalorder %s182, %s196
      %p198 = scmp.eq.s32.totalorder %s27, 0
      %p199 = por %p197, %p198
      %s200 = ssub.s32 %s28, %s40
      %s201 = ssub.s32 %s29, %s36
      %s202 = sor.u32 %s200, %s201
      %p203 = scmp.eq.s32.totalorder %s202, 0
      %s205 = sadd.s32 %s204, 1
      %s206 = scalar_select %p203, %s204, %s205
      %p209 = pneg %p203
      %p210 = scmp.eq.s32.totalorder %s21, 1
      %p211 = por %p209, %p210
      %p212 = scmp.ne.s32.totalorder %s204, %s207
      %p213 = scmp.eq.s32.totalorder %s21, 0
      %p214 = por %p212, %p213
      %p215 = scmp.ne.s32.totalorder %s204, %s207
      %p216 = scmp.eq.s32.totalorder %s26, 1
      %p217 = por %p215, %p216
      %p218 = scmp.ne.s32.totalorder %s207, %s208
      %p219 = scmp.eq.s32.totalorder %s26, 0
      %p220 = por %p218, %p219
      %p221 = scmp.ne.s32.totalorder %s207, %s208
      %p222 = scmp.eq.s32.totalorder %s27, 1
      %p223 = por %p221, %p222
      %p225 = scmp.ne.s32.totalorder %s208, %s224
      %p226 = scmp.eq.s32.totalorder %s27, 0
      %p227 = por %p225, %p226
      %s228 = ssub.s32 %s28, %s40
      %s229 = ssub.s32 %s29, %s36
      %s230 = sor.u32 %s228, %s229
      %p231 = scmp.eq.s32.totalorder %s230, 0
      %s233 = sadd.s32 %s232, 1
      %s234 = scalar_select %p231, %s232, %s233
      %p237 = pneg %p231
      %p238 = scmp.eq.s32.totalorder %s21, 1
      %p239 = por %p237, %p238
      %p240 = scmp.ne.s32.totalorder %s232, %s235
      %p241 = scmp.eq.s32.totalorder %s21, 0
      %p242 = por %p240, %p241
      %p243 = scmp.ne.s32.totalorder %s232, %s235
      %p244 = scmp.eq.s32.totalorder %s26, 1
      %p245 = por %p243, %p244
      %p246 = scmp.ne.s32.totalorder %s235, %s236
      %p247 = scmp.eq.s32.totalorder %s26, 0
      %p248 = por %p246, %p247
      %p249 = scmp.ne.s32.totalorder %s235, %s236
      %p250 = scmp.eq.s32.totalorder %s27, 1
      %p251 = por %p249, %p250
      %p253 = scmp.ne.s32.totalorder %s236, %s252
      %p254 = scmp.eq.s32.totalorder %s27, 0
      %p255 = por %p253, %p254
      %p256 = scmp.le.s32.totalorder 1, %s21
      %p257 = scmp.lt.s32.totalorder %s21, 3
      %p258 = pnand %p256, %p257
      %p259 = pneg %p258
      // Predicated region
      $region9: #{tpu_custom_call.1} parent=5 // pred_check
        _
      $region10: #{tpu_custom_call.1} parent=5 // pred_check_branch
        %261 = sbr.rel (%p258) target = $region12
      $region11: #{tpu_custom_call.1} parent=5 // pred_region
        %s262 = ssub.s32 %s21, 1
        // Predicated region
        $region13: #{tpu_custom_call.1} parent=11 // pred_check
          %p263 = pneg %p108
        $region14: #{tpu_custom_call.1} parent=11 // pred_check_branch
          %265 = sbr.rel (%p263) target = $region16
        $region15: #{tpu_custom_call.1} parent=11 // pred_region
          _
        $region16: #{tpu_custom_call.1} parent=11 // pred_fallthru
          _
        // Predicated region
        $region17: #{tpu_custom_call.1} parent=11 // pred_check
          %p266 = pneg %p129
        $region18: #{tpu_custom_call.1} parent=11 // pred_check_branch
          %268 = sbr.rel (%p266) target = $region20
        $region19: #{tpu_custom_call.1} parent=11 // pred_region
          _
        $region20: #{tpu_custom_call.1} parent=11 // pred_fallthru
          _
        // Predicated region
        $region21: #{tpu_custom_call.1} parent=11 // pred_check
          %p269 = pneg %p150
        $region22: #{tpu_custom_call.1} parent=11 // pred_check_branch
          %271 = sbr.rel (%p269) target = $region24
        $region23: #{tpu_custom_call.1} parent=11 // pred_region
          _
        $region24: #{tpu_custom_call.1} parent=11 // pred_fallthru
          _
        // Predicated region
        $region25: #{tpu_custom_call.1} parent=11 // pred_check
          %p272 = pneg %p171
        $region26: #{tpu_custom_call.1} parent=11 // pred_check_branch
          %274 = sbr.rel (%p272) target = $region28
        $region27: #{tpu_custom_call.1} parent=11 // pred_region
          _
        $region28: #{tpu_custom_call.1} parent=11 // pred_fallthru
          _
        // Predicated region
        $region29: #{tpu_custom_call.1} parent=11 // pred_check
          %p275 = pneg %p192
        $region30: #{tpu_custom_call.1} parent=11 // pred_check_branch
          %277 = sbr.rel (%p275) target = $region32
        $region31: #{tpu_custom_call.1} parent=11 // pred_region
          _
        $region32: #{tpu_custom_call.1} parent=11 // pred_fallthru
          _
      $region12: #{tpu_custom_call.1} parent=5 // pred_fallthru
        _
      %p278 = scmp.lt.s32.totalorder %s21, 2
      // Predicated region
      $region33: #{tpu_custom_call.1} parent=5 // pred_check
        %p279 = pneg %p278
      $region34: #{tpu_custom_call.1} parent=5 // pred_check_branch
        %281 = sbr.rel (%p279) target = $region36
      $region35: #{tpu_custom_call.1} parent=5 // pred_region
        // Predicated region
        $region37: #{tpu_custom_call.1} parent=35 // pred_check
          %p282 = pneg %p55
        $region38: #{tpu_custom_call.1} parent=35 // pred_check_branch
          %284 = sbr.rel (%p282) target = $region40
        $region39: #{tpu_custom_call.1} parent=35 // pred_region
          %p285 = scmp.lt.s32.totalorder %s28, 1
          %s286 = scalar_select %p285, %s28, 1
          %p287 = scmp.lt.s32.totalorder %s29, 0
          %s288 = scalar_select %p287, %s29, 0
          %s289 = sadd.s32 %s288, %s286
          %s290 = smul.addr %s289, 8
          %s291 = scalar_lea.vmem %s0, %s290
        $region40: #{tpu_custom_call.1} parent=35 // pred_fallthru
          _
        // Predicated region
        $region41: #{tpu_custom_call.1} parent=35 // pred_check
          %p292 = pneg %p81
        $region42: #{tpu_custom_call.1} parent=35 // pred_check_branch
          %294 = sbr.rel (%p292) target = $region44
        $region43: #{tpu_custom_call.1} parent=35 // pred_region
          %p295 = scmp.lt.s32.totalorder %s28, 1
          %s296 = scalar_select %p295, %s28, 1
          %s297 = smul.addr %s296, 8
          %s298 = scalar_lea.vmem %s1, %s297
        $region44: #{tpu_custom_call.1} parent=35 // pred_fallthru
          _
      $region36: #{tpu_custom_call.1} parent=5 // pred_fallthru
        _
      %p299 = scmp.le.s32.totalorder 1, %s21
      %p300 = scmp.lt.s32.totalorder %s21, 3
      %p301 = pnand %p299, %p300
      %p302 = pneg %p301
      // Predicated region
      $region45: #{tpu_custom_call.1} parent=5 // pred_check
        _
      $region46: #{tpu_custom_call.1} parent=5 // pred_check_branch
        %304 = sbr.rel (%p301) target = $region48
      $region47: #{tpu_custom_call.1} parent=5 // pred_region
        %s305 = ssub.s32 %s21, 1
        %p306 = scmp.lt.s32.totalorder %s30, 1
        %s307 = scalar_select %p306, %s30, 1
        %p308 = scmp.lt.s32.totalorder %s31, 0
        %s309 = scalar_select %p308, %s31, 0
        %s310 = sadd.s32 %s309, %s307
        %s311 = smul.addr %s310, 8
        %s312 = scalar_lea.vmem %s0, %s311
        %p313 = pneg %p61
        %p314 = pneg %p58
        %p315 = scmp.lt.s32.totalorder %s30, 1
        %s316 = scalar_select %p315, %s30, 1
        %s317 = smul.addr %s316, 8
        %s318 = scalar_lea.vmem %s1, %s317
        %p319 = pneg %p87
        %p320 = pneg %p84
        %p321 = pneg %p108
        %p322 = pneg %p105
        %p323 = pneg %p129
        %p324 = pneg %p126
        %p325 = pneg %p150
        %p326 = pneg %p147
        %p327 = pneg %p171
        %p328 = pneg %p168
        %p329 = pneg %p192
        %p330 = pneg %p189
        %p331 = pneg %p220
        %p332 = pneg %p217
        %s333 = sand.u32 %s207, 1
        %s334 = scalar_lea.sflag [#allocation5], %s333
        %s335 = sand.u32 %s207, 1
        %s336 = smul.addr %s335, 8
        %s337 = scalar_lea.vmem [#allocation4], %s336
        %p338 = pneg %p248
        %p339 = pneg %p245
        %s340 = sand.u32 %s235, 1
        %s341 = scalar_lea.sflag [#allocation7], %s340
        %s342 = sand.u32 %s235, 1
        %s343 = smul.addr %s342, 32
        %s344 = scalar_lea.vmem [#allocation6], %s343
        %p345 = scmp.lt.s32.totalorder %s30, 1
        %s346 = scalar_select %p345, %s30, 1
        %p347 = scmp.lt.s32.totalorder %s31, 0
        %s348 = scalar_select %p347, %s31, 0
        %s349 = sadd.s32 %s348, %s346
        %s350 = smul.addr %s349, 8
        %s351 = scalar_lea.vmem %s0, %s350
        %p352 = scmp.lt.s32.totalorder %s30, 1
        %s353 = scalar_select %p352, %s30, 1
        %s354 = smul.addr %s353, 8
        %s355 = scalar_lea.vmem %s1, %s354
        %p357 = scmp.eq.s32.totalorder %s31, 0
        // Predicated region
        $region49: #{tpu_custom_call.1} parent=47 // pred_check
          %p358 = pneg %p357
        $region50: #{tpu_custom_call.1} parent=47 // pred_check_branch
          %360 = sbr.rel (%p358) target = $region52
        $region51: #{tpu_custom_call.1} parent=47 // pred_region
          %v361 = vld [vmem:[%s355] sm:$0xff]
          %v362 = vpack.c.bf16 %v361, %v361
          %v363 = vld [vmem:[%s3] sm:$0xf]
          %v364 = vld [vmem:[%s3 + $0x4] sm:$0xf]
          %v365 = vld [vmem:[%s3 + $0x8] sm:$0xf]
          %v366 = vld [vmem:[%s3 + $0xc] sm:$0xf]
          %v371 = vunpack.c.l.b16 %v363
          %v372 = vunpack.c.l.b16 %v364
          %v373 = vunpack.c.l.b16 %v365
          %v374 = vunpack.c.l.b16 %v366
          %v375 = vpack.c.b16 %v372, %v371
          %v376 = vpack.c.b16 %v374, %v373
          %vm379 = vcmask 261120
          %v381 = vsel %vm379, %v362, 0
          %383 = vmatprep.subr.bf16.mxu0 0
          %384 = vmatpush1.bf16.msra.mxu0 %v375
          %385 = vmatprep.subr.bf16.mxu0 0
          %386 = vmatpush1.bf16.msra.mxu0 %v376
          %387 = vmatprep.subr.bf16.mxu0 0
          %388 = vmatpush1.bf16.msra.mxu0 0
          %389 = vmatprep.subr.bf16.mxu0 0
          %390 = vmatpush1.bf16.msra.mxu0 0
          %391 = vmatprep.subr.bf16.mxu0 0
          %392 = vmatpush1.bf16.msra.mxu0 0
          %393 = vmatprep.subr.bf16.mxu0 0
          %394 = vmatpush1.bf16.msra.mxu0 0
          %395 = vmatprep.subr.bf16.mxu0 0
          %396 = vmatpush1.bf16.msra.mxu0 0
          %397 = vmatprep.subr.bf16.mxu0 0
          %398 = vmatpush1.bf16.msra.mxu0 0
          %399 = vmatprep.subr.bf16.mxu0 0
          %400 = vmatpush1.bf16.msra.mxu0 0
          %401 = vmatprep.subr.bf16.mxu0 0
          %402 = vmatpush1.bf16.msra.mxu0 0
          %403 = vmatprep.subr.bf16.mxu0 0
          %404 = vmatpush1.bf16.msra.mxu0 0
          %405 = vmatprep.subr.bf16.mxu0 0
          %406 = vmatpush1.bf16.msra.mxu0 0
          %407 = vmatprep.subr.bf16.mxu0 0
          %408 = vmatpush1.bf16.msra.mxu0 0
          %409 = vmatprep.subr.bf16.mxu0 0
          %410 = vmatpush1.bf16.msra.mxu0 0
          %411 = vmatprep.subr.bf16.mxu0 0
          %412 = vmatpush1.bf16.msra.mxu0 0
          %413 = vmatprep.subr.bf16.mxu0 0
          %414 = vmatpush1.bf16.msra.mxu0 0
          %415 = vmatprep.mubr.bf16.mxu0 0
          %416 = vmatmul.mubr.bf16.gmra.mrb[0].mxu0 %v381
          %v417 = vpop.f32.mrb[0].mxu0
          %v418 = vadd.f32 0.0, %v417
          %v419 = vpop.f32.mrb[0].mxu0
          %v420 = vpop.f32.mrb[0].mxu0
          %v421 = vpop.f32.mrb[0].mxu0
          %422 = vdwg.mxu0
          %v423 = vpack.c.bf16 %v418, %v418
          %vm424 = vcmask 125952
          %425 = vst.msk [vmem:[#allocation2] sm:$0xf] %vm424, %v423
          %v426 = vld [vmem:[%s4] sm:$0xf]
          %v427 = vld [vmem:[%s4 + $0x4] sm:$0xf]
          %v428 = vld [vmem:[%s4 + $0x8] sm:$0xf]
          %v429 = vld [vmem:[%s4 + $0xc] sm:$0xf]
          %v434 = vunpack.c.l.b16 %v426
          %v435 = vunpack.c.l.b16 %v427
          %v436 = vunpack.c.l.b16 %v428
          %v437 = vunpack.c.l.b16 %v429
          %v438 = vpack.c.b16 %v435, %v434
          %v439 = vpack.c.b16 %v437, %v436
          %442 = vmatprep.subr.bf16.mxu0 0
          %443 = vmatpush1.bf16.msra.mxu0 %v438
          %444 = vmatprep.subr.bf16.mxu0 0
          %445 = vmatpush1.bf16.msra.mxu0 %v439
          %446 = vmatprep.subr.bf16.mxu0 0
          %447 = vmatpush1.bf16.msra.mxu0 0
          %448 = vmatprep.subr.bf16.mxu0 0
          %449 = vmatpush1.bf16.msra.mxu0 0
          %450 = vmatprep.subr.bf16.mxu0 0
          %451 = vmatpush1.bf16.msra.mxu0 0
          %452 = vmatprep.subr.bf16.mxu0 0
          %453 = vmatpush1.bf16.msra.mxu0 0
          %454 = vmatprep.subr.bf16.mxu0 0
          %455 = vmatpush1.bf16.msra.mxu0 0
          %456 = vmatprep.subr.bf16.mxu0 0
          %457 = vmatpush1.bf16.msra.mxu0 0
          %458 = vmatprep.subr.bf16.mxu0 0
          %459 = vmatpush1.bf16.msra.mxu0 0
          %460 = vmatprep.subr.bf16.mxu0 0
          %461 = vmatpush1.bf16.msra.mxu0 0
          %462 = vmatprep.subr.bf16.mxu0 0
          %463 = vmatpush1.bf16.msra.mxu0 0
          %464 = vmatprep.subr.bf16.mxu0 0
          %465 = vmatpush1.bf16.msra.mxu0 0
          %466 = vmatprep.subr.bf16.mxu0 0
          %467 = vmatpush1.bf16.msra.mxu0 0
          %468 = vmatprep.subr.bf16.mxu0 0
          %469 = vmatpush1.bf16.msra.mxu0 0
          %470 = vmatprep.subr.bf16.mxu0 0
          %471 = vmatpush1.bf16.msra.mxu0 0
          %472 = vmatprep.subr.bf16.mxu0 0
          %473 = vmatpush1.bf16.msra.mxu0 0
          %474 = vmatprep.mubr.bf16.mxu0 0
          %475 = vmatmul.mubr.bf16.gmra.mrb[0].mxu0 %v381
          %v476 = vpop.f32.mrb[0].mxu0
          %v477 = vadd.f32 0.0, %v476
          %v478 = vpop.f32.mrb[0].mxu0
          %v479 = vpop.f32.mrb[0].mxu0
          %v480 = vpop.f32.mrb[0].mxu0
          %481 = vdwg.mxu0
          %v482 = vpack.c.bf16 %v477, %v477
          %s483 = scalar_lea.vmem [#allocation2], 16
          %484 = vst.msk [vmem:[%s483] sm:$0xf] %vm424, %v482
          %s485 = scalar_lea.vmem %s3, 16
          %v486 = vld [vmem:[%s485] sm:$0xf]
          %v487 = vld [vmem:[%s485 + $0x4] sm:$0xf]
          %v488 = vld [vmem:[%s485 + $0x8] sm:$0xf]
          %v489 = vld [vmem:[%s485 + $0xc] sm:$0xf]
          %v494 = vunpack.c.l.b16 %v486
          %v495 = vunpack.c.l.b16 %v487
          %v496 = vunpack.c.l.b16 %v488
          %v497 = vunpack.c.l.b16 %v489
          %v498 = vpack.c.b16 %v495, %v494
          %v499 = vpack.c.b16 %v497, %v496
          %502 = vmatprep.subr.bf16.mxu0 0
          %503 = vmatpush1.bf16.msra.mxu0 %v498
          %504 = vmatprep.subr.bf16.mxu0 0
          %505 = vmatpush1.bf16.msra.mxu0 %v499
          %506 = vmatprep.subr.bf16.mxu0 0
          %507 = vmatpush1.bf16.msra.mxu0 0
          %508 = vmatprep.subr.bf16.mxu0 0
          %509 = vmatpush1.bf16.msra.mxu0 0
          %510 = vmatprep.subr.bf16.mxu0 0
          %511 = vmatpush1.bf16.msra.mxu0 0
          %512 = vmatprep.subr.bf16.mxu0 0
          %513 = vmatpush1.bf16.msra.mxu0 0
          %514 = vmatprep.subr.bf16.mxu0 0
          %515 = vmatpush1.bf16.msra.mxu0 0
          %516 = vmatprep.subr.bf16.mxu0 0
          %517 = vmatpush1.bf16.msra.mxu0 0
          %518 = vmatprep.subr.bf16.mxu0 0
          %519 = vmatpush1.bf16.msra.mxu0 0
          %520 = vmatprep.subr.bf16.mxu0 0
          %521 = vmatpush1.bf16.msra.mxu0 0
          %522 = vmatprep.subr.bf16.mxu0 0
          %523 = vmatpush1.bf16.msra.mxu0 0
          %524 = vmatprep.subr.bf16.mxu0 0
          %525 = vmatpush1.bf16.msra.mxu0 0
          %526 = vmatprep.subr.bf16.mxu0 0
          %527 = vmatpush1.bf16.msra.mxu0 0
          %528 = vmatprep.subr.bf16.mxu0 0
          %529 = vmatpush1.bf16.msra.mxu0 0
          %530 = vmatprep.subr.bf16.mxu0 0
          %531 = vmatpush1.bf16.msra.mxu0 0
          %532 = vmatprep.subr.bf16.mxu0 0
          %533 = vmatpush1.bf16.msra.mxu0 0
          %534 = vmatprep.mubr.bf16.mxu0 0
          %535 = vmatmul.mubr.bf16.gmra.mrb[0].mxu0 %v381
          %v536 = vpop.f32.mrb[0].mxu0
          %v537 = vadd.f32 0.0, %v536
          %v538 = vpop.f32.mrb[0].mxu0
          %v539 = vpop.f32.mrb[0].mxu0
          %v540 = vpop.f32.mrb[0].mxu0
          %541 = vdwg.mxu0
          %v542 = vpack.c.bf16 %v537, %v537
          %s543 = scalar_lea.vmem [#allocation2], 4
          %544 = vst.msk [vmem:[%s543] sm:$0xf] %vm424, %v542
          %s545 = scalar_lea.vmem %s4, 16
          %v546 = vld [vmem:[%s545] sm:$0xf]
          %v547 = vld [vmem:[%s545 + $0x4] sm:$0xf]
          %v548 = vld [vmem:[%s545 + $0x8] sm:$0xf]
          %v549 = vld [vmem:[%s545 + $0xc] sm:$0xf]
          %v554 = vunpack.c.l.b16 %v546
          %v555 = vunpack.c.l.b16 %v547
          %v556 = vunpack.c.l.b16 %v548
          %v557 = vunpack.c.l.b16 %v549
          %v558 = vpack.c.b16 %v555, %v554
          %v559 = vpack.c.b16 %v557, %v556
          %562 = vmatprep.subr.bf16.mxu0 0
          %563 = vmatpush1.bf16.msra.mxu0 %v558
          %564 = vmatprep.subr.bf16.mxu0 0
          %565 = vmatpush1.bf16.msra.mxu0 %v559
          %566 = vmatprep.subr.bf16.mxu0 0
          %567 = vmatpush1.bf16.msra.mxu0 0
          %568 = vmatprep.subr.bf16.mxu0 0
          %569 = vmatpush1.bf16.msra.mxu0 0
          %570 = vmatprep.subr.bf16.mxu0 0
          %571 = vmatpush1.bf16.msra.mxu0 0
          %572 = vmatprep.subr.bf16.mxu0 0
          %573 = vmatpush1.bf16.msra.mxu0 0
          %574 = vmatprep.subr.bf16.mxu0 0
          %575 = vmatpush1.bf16.msra.mxu0 0
          %576 = vmatprep.subr.bf16.mxu0 0
          %577 = vmatpush1.bf16.msra.mxu0 0
          %578 = vmatprep.subr.bf16.mxu0 0
          %579 = vmatpush1.bf16.msra.mxu0 0
          %580 = vmatprep.subr.bf16.mxu0 0
          %581 = vmatpush1.bf16.msra.mxu0 0
          %582 = vmatprep.subr.bf16.mxu0 0
          %583 = vmatpush1.bf16.msra.mxu0 0
          %584 = vmatprep.subr.bf16.mxu0 0
          %585 = vmatpush1.bf16.msra.mxu0 0
          %586 = vmatprep.subr.bf16.mxu0 0
          %587 = vmatpush1.bf16.msra.mxu0 0
          %588 = vmatprep.subr.bf16.mxu0 0
          %589 = vmatpush1.bf16.msra.mxu0 0
          %590 = vmatprep.subr.bf16.mxu0 0
          %591 = vmatpush1.bf16.msra.mxu0 0
          %592 = vmatprep.subr.bf16.mxu0 0
          %593 = vmatpush1.bf16.msra.mxu0 0
          %594 = vmatprep.mubr.bf16.mxu0 0
          %595 = vmatmul.mubr.bf16.gmra.mrb[0].mxu0 %v381
          %v596 = vpop.f32.mrb[0].mxu0
          %v597 = vadd.f32 0.0, %v596
          %v598 = vpop.f32.mrb[0].mxu0
          %v599 = vpop.f32.mrb[0].mxu0
          %v600 = vpop.f32.mrb[0].mxu0
          %601 = vdwg.mxu0
          %v602 = vpack.c.bf16 %v597, %v597
          %s603 = scalar_lea.vmem [#allocation2], 20
          %604 = vst.msk [vmem:[%s603] sm:$0xf] %vm424, %v602
          %s605 = scalar_lea.vmem %s3, 32
          %v606 = vld [vmem:[%s605] sm:$0xf]
          %v607 = vld [vmem:[%s605 + $0x4] sm:$0xf]
          %v608 = vld [vmem:[%s605 + $0x8] sm:$0xf]
          %v609 = vld [vmem:[%s605 + $0xc] sm:$0xf]
          %v614 = vunpack.c.l.b16 %v606
          %v615 = vunpack.c.l.b16 %v607
          %v616 = vunpack.c.l.b16 %v608
          %v617 = vunpack.c.l.b16 %v609
          %v618 = vpack.c.b16 %v615, %v614
          %v619 = vpack.c.b16 %v617, %v616
          %622 = vmatprep.subr.bf16.mxu0 0
          %623 = vmatpush1.bf16.msra.mxu0 %v618
          %624 = vmatprep.subr.bf16.mxu0 0
          %625 = vmatpush1.bf16.msra.mxu0 %v619
          %626 = vmatprep.subr.bf16.mxu0 0
          %627 = vmatpush1.bf16.msra.mxu0 0
          %628 = vmatprep.subr.bf16.mxu0 0
          %629 = vmatpush1.bf16.msra.mxu0 0
          %630 = vmatprep.subr.bf16.mxu0 0
          %631 = vmatpush1.bf16.msra.mxu0 0
          %632 = vmatprep.subr.bf16.mxu0 0
          %633 = vmatpush1.bf16.msra.mxu0 0
          %634 = vmatprep.subr.bf16.mxu0 0
          %635 = vmatpush1.bf16.msra.mxu0 0
          %636 = vmatprep.subr.bf16.mxu0 0
          %637 = vmatpush1.bf16.msra.mxu0 0
          %638 = vmatprep.subr.bf16.mxu0 0
          %639 = vmatpush1.bf16.msra.mxu0 0
          %640 = vmatprep.subr.bf16.mxu0 0
          %641 = vmatpush1.bf16.msra.mxu0 0
          %642 = vmatprep.subr.bf16.mxu0 0
          %643 = vmatpush1.bf16.msra.mxu0 0
          %644 = vmatprep.subr.bf16.mxu0 0
          %645 = vmatpush1.bf16.msra.mxu0 0
          %646 = vmatprep.subr.bf16.mxu0 0
          %647 = vmatpush1.bf16.msra.mxu0 0
          %648 = vmatprep.subr.bf16.mxu0 0
          %649 = vmatpush1.bf16.msra.mxu0 0
          %650 = vmatprep.subr.bf16.mxu0 0
          %651 = vmatpush1.bf16.msra.mxu0 0
          %652 = vmatprep.subr.bf16.mxu0 0
          %653 = vmatpush1.bf16.msra.mxu0 0
          %654 = vmatprep.mubr.bf16.mxu0 0
          %655 = vmatmul.mubr.bf16.gmra.mrb[0].mxu0 %v381
          %v656 = vpop.f32.mrb[0].mxu0
          %v657 = vadd.f32 0.0, %v656
          %v658 = vpop.f32.mrb[0].mxu0
          %v659 = vpop.f32.mrb[0].mxu0
          %v660 = vpop.f32.mrb[0].mxu0
          %661 = vdwg.mxu0
          %v662 = vpack.c.bf16 %v657, %v657
          %s663 = scalar_lea.vmem [#allocation2], 8
          %664 = vst.msk [vmem:[%s663] sm:$0xf] %vm424, %v662
          %s665 = scalar_lea.vmem %s4, 32
          %v666 = vld [vmem:[%s665] sm:$0xf]
          %v667 = vld [vmem:[%s665 + $0x4] sm:$0xf]
          %v668 = vld [vmem:[%s665 + $0x8] sm:$0xf]
          %v669 = vld [vmem:[%s665 + $0xc] sm:$0xf]
          %v674 = vunpack.c.l.b16 %v666
          %v675 = vunpack.c.l.b16 %v667
          %v676 = vunpack.c.l.b16 %v668
          %v677 = vunpack.c.l.b16 %v669
          %v678 = vpack.c.b16 %v675, %v674
          %v679 = vpack.c.b16 %v677, %v676
          %682 = vmatprep.subr.bf16.mxu0 0
          %683 = vmatpush1.bf16.msra.mxu0 %v678
          %684 = vmatprep.subr.bf16.mxu0 0
          %685 = vmatpush1.bf16.msra.mxu0 %v679
          %686 = vmatprep.subr.bf16.mxu0 0
          %687 = vmatpush1.bf16.msra.mxu0 0
          %688 = vmatprep.subr.bf16.mxu0 0
          %689 = vmatpush1.bf16.msra.mxu0 0
          %690 = vmatprep.subr.bf16.mxu0 0
          %691 = vmatpush1.bf16.msra.mxu0 0
          %692 = vmatprep.subr.bf16.mxu0 0
          %693 = vmatpush1.bf16.msra.mxu0 0
          %694 = vmatprep.subr.bf16.mxu0 0
          %695 = vmatpush1.bf16.msra.mxu0 0
          %696 = vmatprep.subr.bf16.mxu0 0
          %697 = vmatpush1.bf16.msra.mxu0 0
          %698 = vmatprep.subr.bf16.mxu0 0
          %699 = vmatpush1.bf16.msra.mxu0 0
          %700 = vmatprep.subr.bf16.mxu0 0
          %701 = vmatpush1.bf16.msra.mxu0 0
          %702 = vmatprep.subr.bf16.mxu0 0
          %703 = vmatpush1.bf16.msra.mxu0 0
          %704 = vmatprep.subr.bf16.mxu0 0
          %705 = vmatpush1.bf16.msra.mxu0 0
          %706 = vmatprep.subr.bf16.mxu0 0
          %707 = vmatpush1.bf16.msra.mxu0 0
          %708 = vmatprep.subr.bf16.mxu0 0
          %709 = vmatpush1.bf16.msra.mxu0 0
          %710 = vmatprep.subr.bf16.mxu0 0
          %711 = vmatpush1.bf16.msra.mxu0 0
          %712 = vmatprep.subr.bf16.mxu0 0
          %713 = vmatpush1.bf16.msra.mxu0 0
          %714 = vmatprep.mubr.bf16.mxu0 0
          %715 = vmatmul.mubr.bf16.gmra.mrb[0].mxu0 %v381
          %v716 = vpop.f32.mrb[0].mxu0
          %v717 = vadd.f32 0.0, %v716
          %v718 = vpop.f32.mrb[0].mxu0
          %v719 = vpop.f32.mrb[0].mxu0
          %v720 = vpop.f32.mrb[0].mxu0
          %721 = vdwg.mxu0
          %v722 = vpack.c.bf16 %v717, %v717
          %s723 = scalar_lea.vmem [#allocation2], 24
          %724 = vst.msk [vmem:[%s723] sm:$0xf] %vm424, %v722
          %s725 = scalar_lea.vmem %s3, 48
          %v726 = vld [vmem:[%s725] sm:$0xf]
          %v727 = vld [vmem:[%s725 + $0x4] sm:$0xf]
          %v728 = vld [vmem:[%s725 + $0x8] sm:$0xf]
          %v729 = vld [vmem:[%s725 + $0xc] sm:$0xf]
          %v734 = vunpack.c.l.b16 %v726
          %v735 = vunpack.c.l.b16 %v727
          %v736 = vunpack.c.l.b16 %v728
          %v737 = vunpack.c.l.b16 %v729
          %v738 = vpack.c.b16 %v735, %v734
          %v739 = vpack.c.b16 %v737, %v736
          %742 = vmatprep.subr.bf16.mxu0 0
          %743 = vmatpush1.bf16.msra.mxu0 %v738
          %744 = vmatprep.subr.bf16.mxu0 0
          %745 = vmatpush1.bf16.msra.mxu0 %v739
          %746 = vmatprep.subr.bf16.mxu0 0
          %747 = vmatpush1.bf16.msra.mxu0 0
          %748 = vmatprep.subr.bf16.mxu0 0
          %749 = vmatpush1.bf16.msra.mxu0 0
          %750 = vmatprep.subr.bf16.mxu0 0
          %751 = vmatpush1.bf16.msra.mxu0 0
          %752 = vmatprep.subr.bf16.mxu0 0
          %753 = vmatpush1.bf16.msra.mxu0 0
          %754 = vmatprep.subr.bf16.mxu0 0
          %755 = vmatpush1.bf16.msra.mxu0 0
          %756 = vmatprep.subr.bf16.mxu0 0
          %757 = vmatpush1.bf16.msra.mxu0 0
          %758 = vmatprep.subr.bf16.mxu0 0
          %759 = vmatpush1.bf16.msra.mxu0 0
          %760 = vmatprep.subr.bf16.mxu0 0
          %761 = vmatpush1.bf16.msra.mxu0 0
          %762 = vmatprep.subr.bf16.mxu0 0
          %763 = vmatpush1.bf16.msra.mxu0 0
          %764 = vmatprep.subr.bf16.mxu0 0
          %765 = vmatpush1.bf16.msra.mxu0 0
          %766 = vmatprep.subr.bf16.mxu0 0
          %767 = vmatpush1.bf16.msra.mxu0 0
          %768 = vmatprep.subr.bf16.mxu0 0
          %769 = vmatpush1.bf16.msra.mxu0 0
          %770 = vmatprep.subr.bf16.mxu0 0
          %771 = vmatpush1.bf16.msra.mxu0 0
          %772 = vmatprep.subr.bf16.mxu0 0
          %773 = vmatpush1.bf16.msra.mxu0 0
          %774 = vmatprep.mubr.bf16.mxu0 0
          %775 = vmatmul.mubr.bf16.gmra.mrb[0].mxu0 %v381
          %v776 = vpop.f32.mrb[0].mxu0
          %v777 = vadd.f32 0.0, %v776
          %v778 = vpop.f32.mrb[0].mxu0
          %v779 = vpop.f32.mrb[0].mxu0
          %v780 = vpop.f32.mrb[0].mxu0
          %781 = vdwg.mxu0
          %v782 = vpack.c.bf16 %v777, %v777
          %s783 = scalar_lea.vmem [#allocation2], 12
          %784 = vst.msk [vmem:[%s783] sm:$0xf] %vm424, %v782
          %s785 = scalar_lea.vmem %s4, 48
          %v786 = vld [vmem:[%s785] sm:$0xf]
          %v787 = vld [vmem:[%s785 + $0x4] sm:$0xf]
          %v788 = vld [vmem:[%s785 + $0x8] sm:$0xf]
          %v789 = vld [vmem:[%s785 + $0xc] sm:$0xf]
          %v794 = vunpack.c.l.b16 %v786
          %v795 = vunpack.c.l.b16 %v787
          %v796 = vunpack.c.l.b16 %v788
          %v797 = vunpack.c.l.b16 %v789
          %v798 = vpack.c.b16 %v795, %v794
          %v799 = vpack.c.b16 %v797, %v796
          %802 = vmatprep.subr.bf16.mxu0 0
          %803 = vmatpush1.bf16.msra.mxu0 %v798
          %804 = vmatprep.subr.bf16.mxu0 0
          %805 = vmatpush1.bf16.msra.mxu0 %v799
          %806 = vmatprep.subr.bf16.mxu0 0
          %807 = vmatpush1.bf16.msra.mxu0 0
          %808 = vmatprep.subr.bf16.mxu0 0
          %809 = vmatpush1.bf16.msra.mxu0 0
          %810 = vmatprep.subr.bf16.mxu0 0
          %811 = vmatpush1.bf16.msra.mxu0 0
          %812 = vmatprep.subr.bf16.mxu0 0
          %813 = vmatpush1.bf16.msra.mxu0 0
          %814 = vmatprep.subr.bf16.mxu0 0
          %815 = vmatpush1.bf16.msra.mxu0 0
          %816 = vmatprep.subr.bf16.mxu0 0
          %817 = vmatpush1.bf16.msra.mxu0 0
          %818 = vmatprep.subr.bf16.mxu0 0
          %819 = vmatpush1.bf16.msra.mxu0 0
          %820 = vmatprep.subr.bf16.mxu0 0
          %821 = vmatpush1.bf16.msra.mxu0 0
          %822 = vmatprep.subr.bf16.mxu0 0
          %823 = vmatpush1.bf16.msra.mxu0 0
          %824 = vmatprep.subr.bf16.mxu0 0
          %825 = vmatpush1.bf16.msra.mxu0 0
          %826 = vmatprep.subr.bf16.mxu0 0
          %827 = vmatpush1.bf16.msra.mxu0 0
          %828 = vmatprep.subr.bf16.mxu0 0
          %829 = vmatpush1.bf16.msra.mxu0 0
          %830 = vmatprep.subr.bf16.mxu0 0
          %831 = vmatpush1.bf16.msra.mxu0 0
          %832 = vmatprep.subr.bf16.mxu0 0
          %833 = vmatpush1.bf16.msra.mxu0 0
          %834 = vmatprep.mubr.bf16.mxu0 0
          %835 = vmatmul.mubr.bf16.gmra.mrb[0].mxu0 %v381
          %v836 = vpop.f32.mrb[0].mxu0
          %v837 = vadd.f32 0.0, %v836
          %v838 = vpop.f32.mrb[0].mxu0
          %v839 = vpop.f32.mrb[0].mxu0
          %v840 = vpop.f32.mrb[0].mxu0
          %841 = vdwg.mxu0
          %v842 = vpack.c.bf16 %v837, %v837
          %s843 = scalar_lea.vmem [#allocation2], 28
          %844 = vst.msk [vmem:[%s843] sm:$0xf] %vm424, %v842
        $region52: #{tpu_custom_call.1} parent=47 // pred_fallthru
          _
        %v845 = vld [vmem:[%s351] sm:$0xff]
        %v846 = vpack.c.bf16 %v845, %v845
        %v847 = vld [vmem:[%s2] sm:$0xf]
        %v848 = vld [vmem:[%s2 + $0x4] sm:$0xf]
        %v849 = vld [vmem:[%s2 + $0x8] sm:$0xf]
        %v850 = vld [vmem:[%s2 + $0xc] sm:$0xf]
        %v855 = vunpack.c.l.b16 %v847
        %v856 = vunpack.c.l.b16 %v848
        %v857 = vunpack.c.l.b16 %v849
        %v858 = vunpack.c.l.b16 %v850
        %v859 = vpack.c.b16 %v856, %v855
        %v860 = vpack.c.b16 %v858, %v857
        %vm863 = vcmask 261120
        %v865 = vsel %vm863, %v846, 0
        %867 = vmatprep.subr.bf16.mxu0 0
        %868 = vmatpush1.bf16.msra.mxu0 %v859
        %869 = vmatprep.subr.bf16.mxu0 0
        %870 = vmatpush1.bf16.msra.mxu0 %v860
        %871 = vmatprep.subr.bf16.mxu0 0
        %872 = vmatpush1.bf16.msra.mxu0 0
        %873 = vmatprep.subr.bf16.mxu0 0
        %874 = vmatpush1.bf16.msra.mxu0 0
        %875 = vmatprep.subr.bf16.mxu0 0
        %876 = vmatpush1.bf16.msra.mxu0 0
        %877 = vmatprep.subr.bf16.mxu0 0
        %878 = vmatpush1.bf16.msra.mxu0 0
        %879 = vmatprep.subr.bf16.mxu0 0
        %880 = vmatpush1.bf16.msra.mxu0 0
        %881 = vmatprep.subr.bf16.mxu0 0
        %882 = vmatpush1.bf16.msra.mxu0 0
        %883 = vmatprep.subr.bf16.mxu0 0
        %884 = vmatpush1.bf16.msra.mxu0 0
        %885 = vmatprep.subr.bf16.mxu0 0
        %886 = vmatpush1.bf16.msra.mxu0 0
        %887 = vmatprep.subr.bf16.mxu0 0
        %888 = vmatpush1.bf16.msra.mxu0 0
        %889 = vmatprep.subr.bf16.mxu0 0
        %890 = vmatpush1.bf16.msra.mxu0 0
        %891 = vmatprep.subr.bf16.mxu0 0
        %892 = vmatpush1.bf16.msra.mxu0 0
        %893 = vmatprep.subr.bf16.mxu0 0
        %894 = vmatpush1.bf16.msra.mxu0 0
        %895 = vmatprep.subr.bf16.mxu0 0
        %896 = vmatpush1.bf16.msra.mxu0 0
        %897 = vmatprep.subr.bf16.mxu0 0
        %898 = vmatpush1.bf16.msra.mxu0 0
        %899 = vmatprep.mubr.bf16.mxu0 0
        %900 = vmatmul.mubr.bf16.gmra.mrb[0].mxu0 %v865
        %v901 = vpop.f32.mrb[0].mxu0
        %v902 = vadd.f32 0.0, %v901
        %v903 = vpop.f32.mrb[0].mxu0
        %v904 = vpop.f32.mrb[0].mxu0
        %v905 = vpop.f32.mrb[0].mxu0
        %906 = vdwg.mxu0
        %v907 = vmul.f32 %v902, 0.25
        %v908 = vpack.c.bf16 %v907, %v907
        %v909 = vld [vmem:[#allocation2] sm:$0xf]
        %s910 = scalar_lea.vmem [#allocation2], 16
        %v911 = vld [vmem:[%s910] sm:$0xf]
        %vm912 = vcmask 130048
        %v914 = vsel %vm912, %v908, 0
        %v917 = vsel %vm912, %v909, 0
        %919 = vmatprep.subr.bf16.mxu0 0
        %920 = vmatpush1.bf16.xpose.msra.mxu0 %v917
        %921 = vmatprep.subr.bf16.mxu0 0
        %922 = vmatpush1.bf16.xpose.msra.mxu0 0
        %923 = vmatprep.subr.bf16.mxu0 0
        %924 = vmatpush1.bf16.xpose.msra.mxu0 0
        %925 = vmatprep.subr.bf16.mxu0 0
        %926 = vmatpush1.bf16.xpose.msra.mxu0 0
        %927 = vmatprep.subr.bf16.mxu0 0
        %928 = vmatpush1.bf16.xpose.msra.mxu0 0
        %929 = vmatprep.subr.bf16.mxu0 0
        %930 = vmatpush1.bf16.xpose.msra.mxu0 0
        %931 = vmatprep.subr.bf16.mxu0 0
        %932 = vmatpush1.bf16.xpose.msra.mxu0 0
        %933 = vmatprep.subr.bf16.mxu0 0
        %934 = vmatpush1.bf16.xpose.msra.mxu0 0
        %935 = vmatprep.subr.bf16.mxu0 0
        %936 = vmatpush1.bf16.xpose.msra.mxu0 0
        %937 = vmatprep.subr.bf16.mxu0 0
        %938 = vmatpush1.bf16.xpose.msra.mxu0 0
        %939 = vmatprep.subr.bf16.mxu0 0
        %940 = vmatpush1.bf16.xpose.msra.mxu0 0
        %941 = vmatprep.subr.bf16.mxu0 0
        %942 = vmatpush1.bf16.xpose.msra.mxu0 0
        %943 = vmatprep.subr.bf16.mxu0 0
        %944 = vmatpush1.bf16.xpose.msra.mxu0 0
        %945 = vmatprep.subr.bf16.mxu0 0
        %946 = vmatpush1.bf16.xpose.msra.mxu0 0
        %947 = vmatprep.subr.bf16.mxu0 0
        %948 = vmatpush1.bf16.xpose.msra.mxu0 0
        %949 = vmatprep.subr.bf16.mxu0 0
        %950 = vmatpush1.bf16.xpose.msra.mxu0 0
        %951 = vmatprep.mubr.bf16.mxu0 0
        %952 = vmatmul.mubr.bf16.gmra.mrb[0].mxu0 %v914
        %v953 = vpop.f32.mrb[0].mxu0
        %v954 = vadd.f32 0.0, %v953
        %v955 = vpop.f32.mrb[0].mxu0
        %v956 = vpop.f32.mrb[0].mxu0
        %v957 = vpop.f32.mrb[0].mxu0
        %958 = vdwg.mxu0
        %vm959 = vcmask 64512
        %v960 = vsel %vm959, %v954, -inf
        %961 = vmax.xlane.f32.xlu0 %v960
        %v962 = vpop.xlane.xlu0 %961
        %v963 = vsub.f32 %v954, %v962
        %v964 = vmul.f32 %v963, 1.442695
        %v965 = vpow.pop %v964
        %v966 = vsel %vm959, %v965, 0.0
        %967 = vadd.xlane.f32.xlu0 %v966
        %v968 = vpop.xlane.xlu0 %967
        %v969 = vrcp.pop %v968
        %v970 = vmul.f32 %v965, %v969
        %971 = vst.msk [vmem:[%s344] sm:$0xff] %vm959, %v970
        %v972 = vpack.c.bf16 %v970, %v970
        %v974 = vsel %vm959, %v972, 0
        %vm976 = vcmask 1043456
        %v978 = vsel %vm976, %v911, 0
        %980 = vmatprep.subr.bf16.mxu0 0
        %981 = vmatpush1.bf16.msra.mxu0 %v978
        %982 = vmatprep.subr.bf16.mxu0 0
        %983 = vmatpush1.bf16.msra.mxu0 0
        %984 = vmatprep.subr.bf16.mxu0 0
        %985 = vmatpush1.bf16.msra.mxu0 0
        %986 = vmatprep.subr.bf16.mxu0 0
        %987 = vmatpush1.bf16.msra.mxu0 0
        %988 = vmatprep.subr.bf16.mxu0 0
        %989 = vmatpush1.bf16.msra.mxu0 0
        %990 = vmatprep.subr.bf16.mxu0 0
        %991 = vmatpush1.bf16.msra.mxu0 0
        %992 = vmatprep.subr.bf16.mxu0 0
        %993 = vmatpush1.bf16.msra.mxu0 0
        %994 = vmatprep.subr.bf16.mxu0 0
        %995 = vmatpush1.bf16.msra.mxu0 0
        %996 = vmatprep.subr.bf16.mxu0 0
        %997 = vmatpush1.bf16.msra.mxu0 0
        %998 = vmatprep.subr.bf16.mxu0 0
        %999 = vmatpush1.bf16.msra.mxu0 0
        %1000 = vmatprep.subr.bf16.mxu0 0
        %1001 = vmatpush1.bf16.msra.mxu0 0
        %1002 = vmatprep.subr.bf16.mxu0 0
        %1003 = vmatpush1.bf16.msra.mxu0 0
        %1004 = vmatprep.subr.bf16.mxu0 0
        %1005 = vmatpush1.bf16.msra.mxu0 0
        %1006 = vmatprep.subr.bf16.mxu0 0
        %1007 = vmatpush1.bf16.msra.mxu0 0
        %1008 = vmatprep.subr.bf16.mxu0 0
        %1009 = vmatpush1.bf16.msra.mxu0 0
        %1010 = vmatprep.subr.bf16.mxu0 0
        %1011 = vmatpush1.bf16.msra.mxu0 0
        %1012 = vmatprep.mubr.bf16.mxu0 0
        %1013 = vmatmul.mubr.bf16.gmra.mrb[0].mxu0 %v974
        %v1014 = vpop.f32.mrb[0].mxu0
        %v1015 = vadd.f32 0.0, %v1014
        %v1016 = vpop.f32.mrb[0].mxu0
        %v1017 = vpop.f32.mrb[0].mxu0
        %v1018 = vpop.f32.mrb[0].mxu0
        %1019 = vdwg.mxu0
        %v1020 = vpack.c.bf16 %v1015, %v1015
        %vm1021 = vcmask 125952
        %1022 = vst.msk [vmem:[#allocation3] sm:$0xf] %vm1021, %v1020
        %s1023 = scalar_lea.vmem %s2, 16
        %v1024 = vld [vmem:[%s1023] sm:$0xf]
        %v1025 = vld [vmem:[%s1023 + $0x4] sm:$0xf]
        %v1026 = vld [vmem:[%s1023 + $0x8] sm:$0xf]
        %v1027 = vld [vmem:[%s1023 + $0xc] sm:$0xf]
        %v1032 = vunpack.c.l.b16 %v1024
        %v1033 = vunpack.c.l.b16 %v1025
        %v1034 = vunpack.c.l.b16 %v1026
        %v1035 = vunpack.c.l.b16 %v1027
        %v1036 = vpack.c.b16 %v1033, %v1032
        %v1037 = vpack.c.b16 %v1035, %v1034
        %1040 = vmatprep.subr.bf16.mxu0 0
        %1041 = vmatpush1.bf16.msra.mxu0 %v1036
        %1042 = vmatprep.subr.bf16.mxu0 0
        %1043 = vmatpush1.bf16.msra.mxu0 %v1037
        %1044 = vmatprep.subr.bf16.mxu0 0
        %1045 = vmatpush1.bf16.msra.mxu0 0
        %1046 = vmatprep.subr.bf16.mxu0 0
        %1047 = vmatpush1.bf16.msra.mxu0 0
        %1048 = vmatprep.subr.bf16.mxu0 0
        %1049 = vmatpush1.bf16.msra.mxu0 0
        %1050 = vmatprep.subr.bf16.mxu0 0
        %1051 = vmatpush1.bf16.msra.mxu0 0
        %1052 = vmatprep.subr.bf16.mxu0 0
        %1053 = vmatpush1.bf16.msra.mxu0 0
        %1054 = vmatprep.subr.bf16.mxu0 0
        %1055 = vmatpush1.bf16.msra.mxu0 0
        %1056 = vmatprep.subr.bf16.mxu0 0
        %1057 = vmatpush1.bf16.msra.mxu0 0
        %1058 = vmatprep.subr.bf16.mxu0 0
        %1059 = vmatpush1.bf16.msra.mxu0 0
        %1060 = vmatprep.subr.bf16.mxu0 0
        %1061 = vmatpush1.bf16.msra.mxu0 0
        %1062 = vmatprep.subr.bf16.mxu0 0
        %1063 = vmatpush1.bf16.msra.mxu0 0
        %1064 = vmatprep.subr.bf16.mxu0 0
        %1065 = vmatpush1.bf16.msra.mxu0 0
        %1066 = vmatprep.subr.bf16.mxu0 0
        %1067 = vmatpush1.bf16.msra.mxu0 0
        %1068 = vmatprep.subr.bf16.mxu0 0
        %1069 = vmatpush1.bf16.msra.mxu0 0
        %1070 = vmatprep.subr.bf16.mxu0 0
        %1071 = vmatpush1.bf16.msra.mxu0 0
        %1072 = vmatprep.mubr.bf16.mxu0 0
        %1073 = vmatmul.mubr.bf16.gmra.mrb[0].mxu0 %v865
        %v1074 = vpop.f32.mrb[0].mxu0
        %v1075 = vadd.f32 0.0, %v1074
        %v1076 = vpop.f32.mrb[0].mxu0
        %v1077 = vpop.f32.mrb[0].mxu0
        %v1078 = vpop.f32.mrb[0].mxu0
        %1079 = vdwg.mxu0
        %v1080 = vmul.f32 %v1075, 0.25
        %v1081 = vpack.c.bf16 %v1080, %v1080
        %s1082 = scalar_lea.vmem [#allocation2], 4
        %v1083 = vld [vmem:[%s1082] sm:$0xf]
        %s1084 = scalar_lea.vmem [#allocation2], 20
        %v1085 = vld [vmem:[%s1084] sm:$0xf]
        %v1087 = vsel %vm912, %v1081, 0
        %v1090 = vsel %vm912, %v1083, 0
        %1092 = vmatprep.subr.bf16.mxu0 0
        %1093 = vmatpush1.bf16.xpose.msra.mxu0 %v1090
        %1094 = vmatprep.subr.bf16.mxu0 0
        %1095 = vmatpush1.bf16.xpose.msra.mxu0 0
        %1096 = vmatprep.subr.bf16.mxu0 0
        %1097 = vmatpush1.bf16.xpose.msra.mxu0 0
        %1098 = vmatprep.subr.bf16.mxu0 0
        %1099 = vmatpush1.bf16.xpose.msra.mxu0 0
        %1100 = vmatprep.subr.bf16.mxu0 0
        %1101 = vmatpush1.bf16.xpose.msra.mxu0 0
        %1102 = vmatprep.subr.bf16.mxu0 0
        %1103 = vmatpush1.bf16.xpose.msra.mxu0 0
        %1104 = vmatprep.subr.bf16.mxu0 0
        %1105 = vmatpush1.bf16.xpose.msra.mxu0 0
        %1106 = vmatprep.subr.bf16.mxu0 0
        %1107 = vmatpush1.bf16.xpose.msra.mxu0 0
        %1108 = vmatprep.subr.bf16.mxu0 0
        %1109 = vmatpush1.bf16.xpose.msra.mxu0 0
        %1110 = vmatprep.subr.bf16.mxu0 0
        %1111 = vmatpush1.bf16.xpose.msra.mxu0 0
        %1112 = vmatprep.subr.bf16.mxu0 0
        %1113 = vmatpush1.bf16.xpose.msra.mxu0 0
        %1114 = vmatprep.subr.bf16.mxu0 0
        %1115 = vmatpush1.bf16.xpose.msra.mxu0 0
        %1116 = vmatprep.subr.bf16.mxu0 0
        %1117 = vmatpush1.bf16.xpose.msra.mxu0 0
        %1118 = vmatprep.subr.bf16.mxu0 0
        %1119 = vmatpush1.bf16.xpose.msra.mxu0 0
        %1120 = vmatprep.subr.bf16.mxu0 0
        %1121 = vmatpush1.bf16.xpose.msra.mxu0 0
        %1122 = vmatprep.subr.bf16.mxu0 0
        %1123 = vmatpush1.bf16.xpose.msra.mxu0 0
        %1124 = vmatprep.mubr.bf16.mxu0 0
        %1125 = vmatmul.mubr.bf16.gmra.mrb[0].mxu0 %v1087
        %v1126 = vpop.f32.mrb[0].mxu0
        %v1127 = vadd.f32 0.0, %v1126
        %v1128 = vpop.f32.mrb[0].mxu0
        %v1129 = vpop.f32.mrb[0].mxu0
        %v1130 = vpop.f32.mrb[0].mxu0
        %1131 = vdwg.mxu0
        %v1132 = vsel %vm959, %v1127, -inf
        %1133 = vmax.xlane.f32.xlu0 %v1132
        %v1134 = vpop.xlane.xlu0 %1133
        %v1135 = vsub.f32 %v1127, %v1134
        %v1136 = vmul.f32 %v1135, 1.442695
        %v1137 = vpow.pop %v1136
        %v1138 = vsel %vm959, %v1137, 0.0
        %1139 = vadd.xlane.f32.xlu0 %v1138
        %v1140 = vpop.xlane.xlu0 %1139
        %v1141 = vrcp.pop %v1140
        %v1142 = vmul.f32 %v1137, %v1141
        %s1143 = scalar_lea.vmem %s344, 8 [#allocation6]
        %1144 = vst.msk [vmem:[%s1143] sm:$0xff] %vm959, %v1142
        %v1145 = vpack.c.bf16 %v1142, %v1142
        %v1147 = vsel %vm959, %v1145, 0
        %v1150 = vsel %vm976, %v1085, 0
        %1152 = vmatprep.subr.bf16.mxu0 0
        %1153 = vmatpush1.bf16.msra.mxu0 %v1150
        %1154 = vmatprep.subr.bf16.mxu0 0
        %1155 = vmatpush1.bf16.msra.mxu0 0
        %1156 = vmatprep.subr.bf16.mxu0 0
        %1157 = vmatpush1.bf16.msra.mxu0 0
        %1158 = vmatprep.subr.bf16.mxu0 0
        %1159 = vmatpush1.bf16.msra.mxu0 0
        %1160 = vmatprep.subr.bf16.mxu0 0
        %1161 = vmatpush1.bf16.msra.mxu0 0
        %1162 = vmatprep.subr.bf16.mxu0 0
        %1163 = vmatpush1.bf16.msra.mxu0 0
        %1164 = vmatprep.subr.bf16.mxu0 0
        %1165 = vmatpush1.bf16.msra.mxu0 0
        %1166 = vmatprep.subr.bf16.mxu0 0
        %1167 = vmatpush1.bf16.msra.mxu0 0
        %1168 = vmatprep.subr.bf16.mxu0 0
        %1169 = vmatpush1.bf16.msra.mxu0 0
        %1170 = vmatprep.subr.bf16.mxu0 0
        %1171 = vmatpush1.bf16.msra.mxu0 0
        %1172 = vmatprep.subr.bf16.mxu0 0
        %1173 = vmatpush1.bf16.msra.mxu0 0
        %1174 = vmatprep.subr.bf16.mxu0 0
        %1175 = vmatpush1.bf16.msra.mxu0 0
        %1176 = vmatprep.subr.bf16.mxu0 0
        %1177 = vmatpush1.bf16.msra.mxu0 0
        %1178 = vmatprep.subr.bf16.mxu0 0
        %1179 = vmatpush1.bf16.msra.mxu0 0
        %1180 = vmatprep.subr.bf16.mxu0 0
        %1181 = vmatpush1.bf16.msra.mxu0 0
        %1182 = vmatprep.subr.bf16.mxu0 0
        %1183 = vmatpush1.bf16.msra.mxu0 0
        %1184 = vmatprep.mubr.bf16.mxu0 0
        %1185 = vmatmul.mubr.bf16.gmra.mrb[0].mxu0 %v1147
        %v1186 = vpop.f32.mrb[0].mxu0
        %v1187 = vadd.f32 0.0, %v1186
        %v1188 = vpop.f32.mrb[0].mxu0
        %v1189 = vpop.f32.mrb[0].mxu0
        %v1190 = vpop.f32.mrb[0].mxu0
        %1191 = vdwg.mxu0
        %v1192 = vpack.c.bf16 %v1187, %v1187
        %v1194 = vunpack.c.l.b16 %v1192
        %v1195 = vpack.c.b16 %v1194, %v1194
        %1196 = vrot.lane.b32.xlu0 %v1195, 16
        %v1197 = vpop.permute.xlu0 %1196
        %vm1199 = vcmask 257152
        %1200 = vst.msk [vmem:[#allocation3] sm:$0xf] %vm1199, %v1197
        %s1201 = scalar_lea.vmem %s2, 32
        %v1202 = vld [vmem:[%s1201] sm:$0xf]
        %v1203 = vld [vmem:[%s1201 + $0x4] sm:$0xf]
        %v1204 = vld [vmem:[%s1201 + $0x8] sm:$0xf]
        %v1205 = vld [vmem:[%s1201 + $0xc] sm:$0xf]
        %v1210 = vunpack.c.l.b16 %v1202
        %v1211 = vunpack.c.l.b16 %v1203
        %v1212 = vunpack.c.l.b16 %v1204
        %v1213 = vunpack.c.l.b16 %v1205
        %v1214 = vpack.c.b16 %v1211, %v1210
        %v1215 = vpack.c.b16 %v1213, %v1212
        %1218 = vmatprep.subr.bf16.mxu0 0
        %1219 = vmatpush1.bf16.msra.mxu0 %v1214
        %1220 = vmatprep.subr.bf16.mxu0 0
        %1221 = vmatpush1.bf16.msra.mxu0 %v1215
        %1222 = vmatprep.subr.bf16.mxu0 0
        %1223 = vmatpush1.bf16.msra.mxu0 0
        %1224 = vmatprep.subr.bf16.mxu0 0
        %1225 = vmatpush1.bf16.msra.mxu0 0
        %1226 = vmatprep.subr.bf16.mxu0 0
        %1227 = vmatpush1.bf16.msra.mxu0 0
        %1228 = vmatprep.subr.bf16.mxu0 0
        %1229 = vmatpush1.bf16.msra.mxu0 0
        %1230 = vmatprep.subr.bf16.mxu0 0
        %1231 = vmatpush1.bf16.msra.mxu0 0
        %1232 = vmatprep.subr.bf16.mxu0 0
        %1233 = vmatpush1.bf16.msra.mxu0 0
        %1234 = vmatprep.subr.bf16.mxu0 0
        %1235 = vmatpush1.bf16.msra.mxu0 0
        %1236 = vmatprep.subr.bf16.mxu0 0
        %1237 = vmatpush1.bf16.msra.mxu0 0
        %1238 = vmatprep.subr.bf16.mxu0 0
        %1239 = vmatpush1.bf16.msra.mxu0 0
        %1240 = vmatprep.subr.bf16.mxu0 0
        %1241 = vmatpush1.bf16.msra.mxu0 0
        %1242 = vmatprep.subr.bf16.mxu0 0
        %1243 = vmatpush1.bf16.msra.mxu0 0
        %1244 = vmatprep.subr.bf16.mxu0 0
        %1245 = vmatpush1.bf16.msra.mxu0 0
        %1246 = vmatprep.subr.bf16.mxu0 0
        %1247 = vmatpush1.bf16.msra.mxu0 0
        %1248 = vmatprep.subr.bf16.mxu0 0
        %1249 = vmatpush1.bf16.msra.mxu0 0
        %1250 = vmatprep.mubr.bf16.mxu0 0
        %1251 = vmatmul.mubr.bf16.gmra.mrb[0].mxu0 %v865
        %v1252 = vpop.f32.mrb[0].mxu0
        %v1253 = vadd.f32 0.0, %v1252
        %v1254 = vpop.f32.mrb[0].mxu0
        %v1255 = vpop.f32.mrb[0].mxu0
        %v1256 = vpop.f32.mrb[0].mxu0
        %1257 = vdwg.mxu0
        %v1258 = vmul.f32 %v1253, 0.25
        %v1259 = vpack.c.bf16 %v1258, %v1258
        %s1260 = scalar_lea.vmem [#allocation2], 8
        %v1261 = vld [vmem:[%s1260] sm:$0xf]
        %s1262 = scalar_lea.vmem [#allocation2], 24
        %v1263 = vld [vmem:[%s1262] sm:$0xf]
        %v1265 = vsel %vm912, %v1259, 0
        %v1268 = vsel %vm912, %v1261, 0
        %1270 = vmatprep.subr.bf16.mxu0 0
        %1271 = vmatpush1.bf16.xpose.msra.mxu0 %v1268
        %1272 = vmatprep.subr.bf16.mxu0 0
        %1273 = vmatpush1.bf16.xpose.msra.mxu0 0
        %1274 = vmatprep.subr.bf16.mxu0 0
        %1275 = vmatpush1.bf16.xpose.msra.mxu0 0
        %1276 = vmatprep.subr.bf16.mxu0 0
        %1277 = vmatpush1.bf16.xpose.msra.mxu0 0
        %1278 = vmatprep.subr.bf16.mxu0 0
        %1279 = vmatpush1.bf16.xpose.msra.mxu0 0
        %1280 = vmatprep.subr.bf16.mxu0 0
        %1281 = vmatpush1.bf16.xpose.msra.mxu0 0
        %1282 = vmatprep.subr.bf16.mxu0 0
        %1283 = vmatpush1.bf16.xpose.msra.mxu0 0
        %1284 = vmatprep.subr.bf16.mxu0 0
        %1285 = vmatpush1.bf16.xpose.msra.mxu0 0
        %1286 = vmatprep.subr.bf16.mxu0 0
        %1287 = vmatpush1.bf16.xpose.msra.mxu0 0
        %1288 = vmatprep.subr.bf16.mxu0 0
        %1289 = vmatpush1.bf16.xpose.msra.mxu0 0
        %1290 = vmatprep.subr.bf16.mxu0 0
        %1291 = vmatpush1.bf16.xpose.msra.mxu0 0
        %1292 = vmatprep.subr.bf16.mxu0 0
        %1293 = vmatpush1.bf16.xpose.msra.mxu0 0
        %1294 = vmatprep.subr.bf16.mxu0 0
        %1295 = vmatpush1.bf16.xpose.msra.mxu0 0
        %1296 = vmatprep.subr.bf16.mxu0 0
        %1297 = vmatpush1.bf16.xpose.msra.mxu0 0
        %1298 = vmatprep.subr.bf16.mxu0 0
        %1299 = vmatpush1.bf16.xpose.msra.mxu0 0
        %1300 = vmatprep.subr.bf16.mxu0 0
        %1301 = vmatpush1.bf16.xpose.msra.mxu0 0
        %1302 = vmatprep.mubr.bf16.mxu0 0
        %1303 = vmatmul.mubr.bf16.gmra.mrb[0].mxu0 %v1265
        %v1304 = vpop.f32.mrb[0].mxu0
        %v1305 = vadd.f32 0.0, %v1304
        %v1306 = vpop.f32.mrb[0].mxu0
        %v1307 = vpop.f32.mrb[0].mxu0
        %v1308 = vpop.f32.mrb[0].mxu0
        %1309 = vdwg.mxu0
        %v1310 = vsel %vm959, %v1305, -inf
        %1311 = vmax.xlane.f32.xlu0 %v1310
        %v1312 = vpop.xlane.xlu0 %1311
        %v1313 = vsub.f32 %v1305, %v1312
        %v1314 = vmul.f32 %v1313, 1.442695
        %v1315 = vpow.pop %v1314
        %v1316 = vsel %vm959, %v1315, 0.0
        %1317 = vadd.xlane.f32.xlu0 %v1316
        %v1318 = vpop.xlane.xlu0 %1317
        %v1319 = vrcp.pop %v1318
        %v1320 = vmul.f32 %v1315, %v1319
        %s1321 = scalar_lea.vmem %s344, 16 [#allocation6]
        %1322 = vst.msk [vmem:[%s1321] sm:$0xff] %vm959, %v1320
        %v1323 = vpack.c.bf16 %v1320, %v1320
        %v1325 = vsel %vm959, %v1323, 0
        %v1328 = vsel %vm976, %v1263, 0
        %1330 = vmatprep.subr.bf16.mxu0 0
        %1331 = vmatpush1.bf16.msra.mxu0 %v1328
        %1332 = vmatprep.subr.bf16.mxu0 0
        %1333 = vmatpush1.bf16.msra.mxu0 0
        %1334 = vmatprep.subr.bf16.mxu0 0
        %1335 = vmatpush1.bf16.msra.mxu0 0
        %1336 = vmatprep.subr.bf16.mxu0 0
        %1337 = vmatpush1.bf16.msra.mxu0 0
        %1338 = vmatprep.subr.bf16.mxu0 0
        %1339 = vmatpush1.bf16.msra.mxu0 0
        %1340 = vmatprep.subr.bf16.mxu0 0
        %1341 = vmatpush1.bf16.msra.mxu0 0
        %1342 = vmatprep.subr.bf16.mxu0 0
        %1343 = vmatpush1.bf16.msra.mxu0 0
        %1344 = vmatprep.subr.bf16.mxu0 0
        %1345 = vmatpush1.bf16.msra.mxu0 0
        %1346 = vmatprep.subr.bf16.mxu0 0
        %1347 = vmatpush1.bf16.msra.mxu0 0
        %1348 = vmatprep.subr.bf16.mxu0 0
        %1349 = vmatpush1.bf16.msra.mxu0 0
        %1350 = vmatprep.subr.bf16.mxu0 0
        %1351 = vmatpush1.bf16.msra.mxu0 0
        %1352 = vmatprep.subr.bf16.mxu0 0
        %1353 = vmatpush1.bf16.msra.mxu0 0
        %1354 = vmatprep.subr.bf16.mxu0 0
        %1355 = vmatpush1.bf16.msra.mxu0 0
        %1356 = vmatprep.subr.bf16.mxu0 0
        %1357 = vmatpush1.bf16.msra.mxu0 0
        %1358 = vmatprep.subr.bf16.mxu0 0
        %1359 = vmatpush1.bf16.msra.mxu0 0
        %1360 = vmatprep.subr.bf16.mxu0 0
        %1361 = vmatpush1.bf16.msra.mxu0 0
        %1362 = vmatprep.mubr.bf16.mxu0 0
        %1363 = vmatmul.mubr.bf16.gmra.mrb[0].mxu0 %v1325
        %v1364 = vpop.f32.mrb[0].mxu0
        %v1365 = vadd.f32 0.0, %v1364
        %v1366 = vpop.f32.mrb[0].mxu0
        %v1367 = vpop.f32.mrb[0].mxu0
        %v1368 = vpop.f32.mrb[0].mxu0
        %1369 = vdwg.mxu0
        %v1370 = vpack.c.bf16 %v1365, %v1365
        %v1372 = vunpack.c.l.b16 %v1370
        %v1373 = vpack.c.b16 %v1372, %v1372
        %1374 = vrot.lane.b32.xlu0 %v1373, 32
        %v1375 = vpop.permute.xlu0 %1374
        %vm1377 = vcmask 388352
        %1378 = vst.msk [vmem:[#allocation3] sm:$0xf] %vm1377, %v1375
        %s1379 = scalar_lea.vmem %s2, 48
        %v1380 = vld [vmem:[%s1379] sm:$0xf]
        %v1381 = vld [vmem:[%s1379 + $0x4] sm:$0xf]
        %v1382 = vld [vmem:[%s1379 + $0x8] sm:$0xf]
        %v1383 = vld [vmem:[%s1379 + $0xc] sm:$0xf]
        %v1388 = vunpack.c.l.b16 %v1380
        %v1389 = vunpack.c.l.b16 %v1381
        %v1390 = vunpack.c.l.b16 %v1382
        %v1391 = vunpack.c.l.b16 %v1383
        %v1392 = vpack.c.b16 %v1389, %v1388
        %v1393 = vpack.c.b16 %v1391, %v1390
        %1396 = vmatprep.subr.bf16.mxu0 0
        %1397 = vmatpush1.bf16.msra.mxu0 %v1392
        %1398 = vmatprep.subr.bf16.mxu0 0
        %1399 = vmatpush1.bf16.msra.mxu0 %v1393
        %1400 = vmatprep.subr.bf16.mxu0 0
        %1401 = vmatpush1.bf16.msra.mxu0 0
        %1402 = vmatprep.subr.bf16.mxu0 0
        %1403 = vmatpush1.bf16.msra.mxu0 0
        %1404 = vmatprep.subr.bf16.mxu0 0
        %1405 = vmatpush1.bf16.msra.mxu0 0
        %1406 = vmatprep.subr.bf16.mxu0 0
        %1407 = vmatpush1.bf16.msra.mxu0 0
        %1408 = vmatprep.subr.bf16.mxu0 0
        %1409 = vmatpush1.bf16.msra.mxu0 0
        %1410 = vmatprep.subr.bf16.mxu0 0
        %1411 = vmatpush1.bf16.msra.mxu0 0
        %1412 = vmatprep.subr.bf16.mxu0 0
        %1413 = vmatpush1.bf16.msra.mxu0 0
        %1414 = vmatprep.subr.bf16.mxu0 0
        %1415 = vmatpush1.bf16.msra.mxu0 0
        %1416 = vmatprep.subr.bf16.mxu0 0
        %1417 = vmatpush1.bf16.msra.mxu0 0
        %1418 = vmatprep.subr.bf16.mxu0 0
        %1419 = vmatpush1.bf16.msra.mxu0 0
        %1420 = vmatprep.subr.bf16.mxu0 0
        %1421 = vmatpush1.bf16.msra.mxu0 0
        %1422 = vmatprep.subr.bf16.mxu0 0
        %1423 = vmatpush1.bf16.msra.mxu0 0
        %1424 = vmatprep.subr.bf16.mxu0 0
        %1425 = vmatpush1.bf16.msra.mxu0 0
        %1426 = vmatprep.subr.bf16.mxu0 0
        %1427 = vmatpush1.bf16.msra.mxu0 0
        %1428 = vmatprep.mubr.bf16.mxu0 0
        %1429 = vmatmul.mubr.bf16.gmra.mrb[0].mxu0 %v865
        %v1430 = vpop.f32.mrb[0].mxu0
        %v1431 = vadd.f32 0.0, %v1430
        %v1432 = vpop.f32.mrb[0].mxu0
        %v1433 = vpop.f32.mrb[0].mxu0
        %v1434 = vpop.f32.mrb[0].mxu0
        %1435 = vdwg.mxu0
        %v1436 = vmul.f32 %v1431, 0.25
        %v1437 = vpack.c.bf16 %v1436, %v1436
        %s1438 = scalar_lea.vmem [#allocation2], 12
        %v1439 = vld [vmem:[%s1438] sm:$0xf]
        %s1440 = scalar_lea.vmem [#allocation2], 28
        %v1441 = vld [vmem:[%s1440] sm:$0xf]
        %v1443 = vsel %vm912, %v1437, 0
        %v1446 = vsel %vm912, %v1439, 0
        %1448 = vmatprep.subr.bf16.mxu0 0
        %1449 = vmatpush1.bf16.xpose.msra.mxu0 %v1446
        %1450 = vmatprep.subr.bf16.mxu0 0
        %1451 = vmatpush1.bf16.xpose.msra.mxu0 0
        %1452 = vmatprep.subr.bf16.mxu0 0
        %1453 = vmatpush1.bf16.xpose.msra.mxu0 0
        %1454 = vmatprep.subr.bf16.mxu0 0
        %1455 = vmatpush1.bf16.xpose.msra.mxu0 0
        %1456 = vmatprep.subr.bf16.mxu0 0
        %1457 = vmatpush1.bf16.xpose.msra.mxu0 0
        %1458 = vmatprep.subr.bf16.mxu0 0
        %1459 = vmatpush1.bf16.xpose.msra.mxu0 0
        %1460 = vmatprep.subr.bf16.mxu0 0
        %1461 = vmatpush1.bf16.xpose.msra.mxu0 0
        %1462 = vmatprep.subr.bf16.mxu0 0
        %1463 = vmatpush1.bf16.xpose.msra.mxu0 0
        %1464 = vmatprep.subr.bf16.mxu0 0
        %1465 = vmatpush1.bf16.xpose.msra.mxu0 0
        %1466 = vmatprep.subr.bf16.mxu0 0
        %1467 = vmatpush1.bf16.xpose.msra.mxu0 0
        %1468 = vmatprep.subr.bf16.mxu0 0
        %1469 = vmatpush1.bf16.xpose.msra.mxu0 0
        %1470 = vmatprep.subr.bf16.mxu0 0
        %1471 = vmatpush1.bf16.xpose.msra.mxu0 0
        %1472 = vmatprep.subr.bf16.mxu0 0
        %1473 = vmatpush1.bf16.xpose.msra.mxu0 0
        %1474 = vmatprep.subr.bf16.mxu0 0
        %1475 = vmatpush1.bf16.xpose.msra.mxu0 0
        %1476 = vmatprep.subr.bf16.mxu0 0
        %1477 = vmatpush1.bf16.xpose.msra.mxu0 0
        %1478 = vmatprep.subr.bf16.mxu0 0
        %1479 = vmatpush1.bf16.xpose.msra.mxu0 0
        %1480 = vmatprep.mubr.bf16.mxu0 0
        %1481 = vmatmul.mubr.bf16.gmra.mrb[0].mxu0 %v1443
        %v1482 = vpop.f32.mrb[0].mxu0
        %v1483 = vadd.f32 0.0, %v1482
        %v1484 = vpop.f32.mrb[0].mxu0
        %v1485 = vpop.f32.mrb[0].mxu0
        %v1486 = vpop.f32.mrb[0].mxu0
        %1487 = vdwg.mxu0
        %v1488 = vsel %vm959, %v1483, -inf
        %1489 = vmax.xlane.f32.xlu0 %v1488
        %v1490 = vpop.xlane.xlu0 %1489
        %v1491 = vsub.f32 %v1483, %v1490
        %v1492 = vmul.f32 %v1491, 1.442695
        %v1493 = vpow.pop %v1492
        %v1494 = vsel %vm959, %v1493, 0.0
        %1495 = vadd.xlane.f32.xlu0 %v1494
        %v1496 = vpop.xlane.xlu0 %1495
        %v1497 = vrcp.pop %v1496
        %v1498 = vmul.f32 %v1493, %v1497
        %s1499 = scalar_lea.vmem %s344, 24 [#allocation6]
        %1500 = vst.msk [vmem:[%s1499] sm:$0xff] %vm959, %v1498
        %v1501 = vpack.c.bf16 %v1498, %v1498
        %v1503 = vsel %vm959, %v1501, 0
        %v1506 = vsel %vm976, %v1441, 0
        %1508 = vmatprep.subr.bf16.mxu0 0
        %1509 = vmatpush1.bf16.msra.mxu0 %v1506
        %1510 = vmatprep.subr.bf16.mxu0 0
        %1511 = vmatpush1.bf16.msra.mxu0 0
        %1512 = vmatprep.subr.bf16.mxu0 0
        %1513 = vmatpush1.bf16.msra.mxu0 0
        %1514 = vmatprep.subr.bf16.mxu0 0
        %1515 = vmatpush1.bf16.msra.mxu0 0
        %1516 = vmatprep.subr.bf16.mxu0 0
        %1517 = vmatpush1.bf16.msra.mxu0 0
        %1518 = vmatprep.subr.bf16.mxu0 0
        %1519 = vmatpush1.bf16.msra.mxu0 0
        %1520 = vmatprep.subr.bf16.mxu0 0
        %1521 = vmatpush1.bf16.msra.mxu0 0
        %1522 = vmatprep.subr.bf16.mxu0 0
        %1523 = vmatpush1.bf16.msra.mxu0 0
        %1524 = vmatprep.subr.bf16.mxu0 0
        %1525 = vmatpush1.bf16.msra.mxu0 0
        %1526 = vmatprep.subr.bf16.mxu0 0
        %1527 = vmatpush1.bf16.msra.mxu0 0
        %1528 = vmatprep.subr.bf16.mxu0 0
        %1529 = vmatpush1.bf16.msra.mxu0 0
        %1530 = vmatprep.subr.bf16.mxu0 0
        %1531 = vmatpush1.bf16.msra.mxu0 0
        %1532 = vmatprep.subr.bf16.mxu0 0
        %1533 = vmatpush1.bf16.msra.mxu0 0
        %1534 = vmatprep.subr.bf16.mxu0 0
        %1535 = vmatpush1.bf16.msra.mxu0 0
        %1536 = vmatprep.subr.bf16.mxu0 0
        %1537 = vmatpush1.bf16.msra.mxu0 0
        %1538 = vmatprep.subr.bf16.mxu0 0
        %1539 = vmatpush1.bf16.msra.mxu0 0
        %1540 = vmatprep.mubr.bf16.mxu0 0
        %1541 = vmatmul.mubr.bf16.gmra.mrb[0].mxu0 %v1503
        %v1542 = vpop.f32.mrb[0].mxu0
        %v1543 = vadd.f32 0.0, %v1542
        %v1544 = vpop.f32.mrb[0].mxu0
        %v1545 = vpop.f32.mrb[0].mxu0
        %v1546 = vpop.f32.mrb[0].mxu0
        %1547 = vdwg.mxu0
        %v1548 = vpack.c.bf16 %v1543, %v1543
        %v1550 = vunpack.c.l.b16 %v1548
        %v1551 = vpack.c.b16 %v1550, %v1550
        %1552 = vrot.lane.b32.xlu0 %v1551, 48
        %v1553 = vpop.permute.xlu0 %1552
        %vm1555 = vcmask 519552
        %1556 = vst.msk [vmem:[#allocation3] sm:$0xf] %vm1555, %v1553
        %v1557 = vld [vmem:[#allocation3] sm:$0xf]
        %v1558 = vld [vmem:[%s5] sm:$0xf]
        %v1559 = vld [vmem:[%s5 + $0x4] sm:$0xf]
        %v1560 = vld [vmem:[%s5 + $0x8] sm:$0xf]
        %v1561 = vld [vmem:[%s5 + $0xc] sm:$0xf]
        %v1562 = vld [vmem:[%s5 + $0x10] sm:$0xf]
        %v1563 = vld [vmem:[%s5 + $0x14] sm:$0xf]
        %v1564 = vld [vmem:[%s5 + $0x18] sm:$0xf]
        %v1565 = vld [vmem:[%s5 + $0x1c] sm:$0xf]
        %v1566 = vld [vmem:[%s6] sm:$0x1]
        %v1568 = vlaneseq
        %v1569 = vshrl.u32 %v1568, 7
        %v1570 = vsub.s32 0, %v1569
        %v1571 = vrot.slane %v1566, %v1570
        %v1581 = vunpack.c.l.b16 %v1558
        %v1582 = vunpack.c.l.b16 %v1559
        %v1583 = vunpack.c.l.b16 %v1560
        %v1584 = vunpack.c.l.b16 %v1561
        %v1585 = vunpack.c.l.b16 %v1562
        %v1586 = vunpack.c.l.b16 %v1563
        %v1587 = vunpack.c.l.b16 %v1564
        %v1588 = vunpack.c.l.b16 %v1565
        %v1589 = vpack.c.b16 %v1582, %v1581
        %v1590 = vpack.c.b16 %v1584, %v1583
        %v1591 = vpack.c.b16 %v1586, %v1585
        %v1592 = vpack.c.b16 %v1588, %v1587
        %vm1597 = vcmask 523264
        %v1599 = vsel %vm1597, %v1557, 0
        %1601 = vmatprep.subr.bf16.mxu0 0
        %1602 = vmatpush1.bf16.msra.mxu0 %v1589
        %1603 = vmatprep.subr.bf16.mxu0 0
        %1604 = vmatpush1.bf16.msra.mxu0 %v1590
        %1605 = vmatprep.subr.bf16.mxu0 0
        %1606 = vmatpush1.bf16.msra.mxu0 %v1591
        %1607 = vmatprep.subr.bf16.mxu0 0
        %1608 = vmatpush1.bf16.msra.mxu0 %v1592
        %1609 = vmatprep.subr.bf16.mxu0 0
        %1610 = vmatpush1.bf16.msra.mxu0 0
        %1611 = vmatprep.subr.bf16.mxu0 0
        %1612 = vmatpush1.bf16.msra.mxu0 0
        %1613 = vmatprep.subr.bf16.mxu0 0
        %1614 = vmatpush1.bf16.msra.mxu0 0
        %1615 = vmatprep.subr.bf16.mxu0 0
        %1616 = vmatpush1.bf16.msra.mxu0 0
        %1617 = vmatprep.subr.bf16.mxu0 0
        %1618 = vmatpush1.bf16.msra.mxu0 0
        %1619 = vmatprep.subr.bf16.mxu0 0
        %1620 = vmatpush1.bf16.msra.mxu0 0
        %1621 = vmatprep.subr.bf16.mxu0 0
        %1622 = vmatpush1.bf16.msra.mxu0 0
        %1623 = vmatprep.subr.bf16.mxu0 0
        %1624 = vmatpush1.bf16.msra.mxu0 0
        %1625 = vmatprep.subr.bf16.mxu0 0
        %1626 = vmatpush1.bf16.msra.mxu0 0
        %1627 = vmatprep.subr.bf16.mxu0 0
        %1628 = vmatpush1.bf16.msra.mxu0 0
        %1629 = vmatprep.subr.bf16.mxu0 0
        %1630 = vmatpush1.bf16.msra.mxu0 0
        %1631 = vmatprep.subr.bf16.mxu0 0
        %1632 = vmatpush1.bf16.msra.mxu0 0
        %1633 = vmatprep.mubr.bf16.mxu0 0
        %1634 = vmatmul.mubr.bf16.gmra.mrb[0].mxu0 %v1599
        %v1635 = vpop.f32.mrb[0].mxu0
        %v1636 = vadd.f32 %v1571, %v1635
        %v1637 = vpop.f32.mrb[0].mxu0
        %v1638 = vpop.f32.mrb[0].mxu0
        %v1639 = vpop.f32.mrb[0].mxu0
        %1640 = vdwg.mxu0
        %1641 = vst.msk [vmem:[%s337] sm:$0xff] %vm863, %v1636
        %s1642 = sand.u32 %s207, 1
        %s1643 = scalar_lea.sflag [#allocation5], %s1642
        %s1644 = sand.u32 %s207, 1
        %s1645 = smul.addr %s1644, 8
        %s1646 = scalar_lea.vmem [#allocation4], %s1645
        %s1647 = sand.u32 %s235, 1
        %s1648 = scalar_lea.sflag [#allocation7], %s1647
        %s1649 = sand.u32 %s235, 1
        %s1650 = smul.addr %s1649, 32
        %s1651 = scalar_lea.vmem [#allocation6], %s1650
        // Predicated region
        $region53: #{tpu_custom_call.1} parent=47 // pred_check
          %p1652 = pneg %p217
        $region54: #{tpu_custom_call.1} parent=47 // pred_check_branch
          %1654 = sbr.rel (%p1652) target = $region56
        $region55: #{tpu_custom_call.1} parent=47 // pred_region
          %s1656 = ssub.s32 128, 128
          %1657 = vsyncadd %s1643, %s1656
          %s1658 = sadd.s32 %s31, %s30
          %s1659 = smul.addr %s1658, 128
          %s1660 = scalar_lea.hbm %s7, %s1659
          %s1662 = sshll.u32 %s1646, 4
          %s1663 = int_to_ptr.vmem [resolvable:$true] %s1662
          %1665 = dma.vmem_to_hbm [thread:$0]  %s1663, 128, %s1660, %s1643
        $region56: #{tpu_custom_call.1} parent=47 // pred_fallthru
          _
        // Predicated region
        $region57: #{tpu_custom_call.1} parent=47 // pred_check
          %p1666 = pneg %p245
        $region58: #{tpu_custom_call.1} parent=47 // pred_check_branch
          %1668 = sbr.rel (%p1666) target = $region60
        $region59: #{tpu_custom_call.1} parent=47 // pred_region
          %s1670 = ssub.s32 512, 512
          %1671 = vsyncadd %s1648, %s1670
          %s1672 = smul.addr %s30, 4
          %s1673 = sadd.s32 %s31, %s1672
          %s1674 = smul.addr %s1673, 128
          %s1675 = scalar_lea.hbm %s8, %s1674
          %s1676 = sshll.u32 %s1651, 4
          %s1677 = int_to_ptr.vmem [resolvable:$true] %s1676
          %1682 = dma.vmem_to_hbm [thread:$0]  %s1677, 512, %s1675, %s1648, 128, 128, 8
        $region60: #{tpu_custom_call.1} parent=47 // pred_fallthru
          _
      $region48: #{tpu_custom_call.1} parent=5 // pred_fallthru
        _
      %p1683 = scmp.le.s32.totalorder 2, %s21
      // Predicated region
      $region61: #{tpu_custom_call.1} parent=5 // pred_check
        %p1684 = pneg %p1683
      $region62: #{tpu_custom_call.1} parent=5 // pred_check_branch
        %1686 = sbr.rel (%p1684) target = $region64
      $region63: #{tpu_custom_call.1} parent=5 // pred_region
        %s1687 = ssub.s32 %s21, 2
        // Predicated region
        $region65: #{tpu_custom_call.1} parent=63 // pred_check
          %p1688 = pneg %p223
        $region66: #{tpu_custom_call.1} parent=63 // pred_check_branch
          %1690 = sbr.rel (%p1688) target = $region68
        $region67: #{tpu_custom_call.1} parent=63 // pred_region
          %s1691 = sand.u32 %s208, 1
          %s1692 = scalar_lea.sflag [#allocation5], %s1691
          %s1693 = sand.u32 %s208, 1
          %s1694 = smul.addr %s1693, 8
          %s1695 = scalar_lea.vmem [#allocation4], %s1694
          %1696 = dma.done %s1692, 128
        $region68: #{tpu_custom_call.1} parent=63 // pred_fallthru
          _
        // Predicated region
        $region69: #{tpu_custom_call.1} parent=63 // pred_check
          %p1697 = pneg %p251
        $region70: #{tpu_custom_call.1} parent=63 // pred_check_branch
          %1699 = sbr.rel (%p1697) target = $region72
        $region71: #{tpu_custom_call.1} parent=63 // pred_region
          %s1700 = sand.u32 %s236, 1
          %s1701 = scalar_lea.sflag [#allocation7], %s1700
          %s1702 = sand.u32 %s236, 1
          %s1703 = smul.addr %s1702, 32
          %s1704 = scalar_lea.vmem [#allocation6], %s1703
          %1705 = dma.done %s1701, 512
        $region72: #{tpu_custom_call.1} parent=63 // pred_fallthru
          _
      $region64: #{tpu_custom_call.1} parent=5 // pred_fallthru
        _
    $region6: #{tpu_custom_call.1} parent=1 // loop_footer
      %s25 = sadd.s32 1, %s21
    $region7: #{tpu_custom_call.1} parent=1 // loop_footer_branch
      %20 = sbr.rel target = $region3
    $region8: #{tpu_custom_call.1} parent=1 // loop_exit
      _
    %1706 = vsyncpa [#allocation5], 1
    %s1707 = scalar_lea.sflag [#allocation5], 1
    %1708 = vsyncpa %s1707, 1
    %1709 = vsyncpa [#allocation7], 1
    %s1710 = scalar_lea.sflag [#allocation7], 1
    %1711 = vsyncpa %s1710, 1

</llo_original>
